<compile_context>
chip_gen: v7x
topology: tpu7x:2x2x1
jax: 0.10.0
libtpu: 0.0.40
codegen_flags: <defaults>
</compile_context>

<pallas_src>
import jax
import jax.numpy as jnp
from jax.experimental import pallas as pl
from jax.experimental.pallas import tpu as pltpu

IMAGE_SIZE = 28 * 28      # 784 = 6*128 + 16 -> would need masked partial stores
OUT_PAD = 896             # 7*128: lane-dense output slab, sliced back to 784 outside


def _round_up(x, m):
    return (x + m - 1) // m * m


def _decoder_kernel(x_ref, w1_ref, b1_ref, w2_ref, b2_ref,
                    w3_ref, b3_ref, w4_ref, b4_ref, o_ref):
    # Layer 1: K == z_dim == 2 -> two VPU broadcast FMAs instead of an MXU matmul.
    x = x_ref[...]                                                    # (TB, 2) f32
    h = x[:, 0:1] * w1_ref[0:1, :] + x[:, 1:2] * w1_ref[1:2, :]       # (TB, 128) f32
    h = jnp.maximum(h + b1_ref[...], 0.0)

    # Layers 2-4: bf16 operands on the MXU, f32 accumulate; bias / act math in f32.
    h = jnp.dot(h.astype(jnp.bfloat16), w2_ref[...],
                preferred_element_type=jnp.float32)                   # (TB, 256)
    h = jnp.maximum(h + b2_ref[...], 0.0)

    h = jnp.dot(h.astype(jnp.bfloat16), w3_ref[...],
                preferred_element_type=jnp.float32)                   # (TB, 512)
    h = jnp.maximum(h + b3_ref[...], 0.0)

    y = jnp.dot(h.astype(jnp.bfloat16), w4_ref[...],
                preferred_element_type=jnp.float32)                   # (TB, 896)
    o_ref[...] = jnp.tanh(y + b4_ref[...]).astype(o_ref.dtype)


def prepare_decoder_params(params):
    """One-time prep: cast MXU-layer weights to bf16 and pad the last layer to a
    lane-dense 896 columns. Biases and the tiny layer-1 weight stay f32."""
    w1, b1, w2, b2, w3, b3, w4, b4 = params
    pad = OUT_PAD - w4.shape[1]
    w4p = jnp.pad(w4, ((0, 0), (0, pad))).astype(jnp.bfloat16)
    b4p = jnp.pad(b4, ((0, 0), (0, pad)))
    return (w1, b1, w2.astype(jnp.bfloat16), b2,
            w3.astype(jnp.bfloat16), b3, w4p, b4p)


def decode_pallas(x, prepared_params, tile_b=256):
    """x: (B, 2) f32 latent codes.  Returns (B, 784) f32."""
    B, z_dim = x.shape
    assert z_dim == 2, "kernel specializes layer 1 for z_dim == 2"
    w1, b1, w2, b2, w3, b3, w4, b4 = prepared_params

    # Batch tile: multiple of 8 (f32 sublane), capped at `tile_b` (256 fills the
    # v6e/v7x 2x256 MXU and is a multiple of the v5e 128x128 MXU dimension).
    tb = min(tile_b, _round_up(B, 8))
    b_pad = _round_up(B, tb)
    if b_pad != B:
        x = jnp.pad(x, ((0, b_pad - B), (0, 0)))
    grid = (b_pad // tb,)

    resident = lambda a: pl.BlockSpec(a.shape, lambda i: (0, 0))

    flops = 2 * b_pad * (z_dim * 128 + 128 * 256 + 256 * 512 + 512 * OUT_PAD)
    bytes_accessed = (x.size * 4 + b_pad * OUT_PAD * 4 +
                      sum(int(p.size) * p.dtype.itemsize for p in prepared_params))

    y = pl.pallas_call(
        _decoder_kernel,
        out_shape=jax.ShapeDtypeStruct((b_pad, OUT_PAD), jnp.float32),
        grid=grid,
        in_specs=[pl.BlockSpec((tb, z_dim), lambda i: (i, 0)),   # streamed x tile
                  resident(w1), resident(b1), resident(w2), resident(b2),
                  resident(w3), resident(b3), resident(w4), resident(b4)],
        out_specs=pl.BlockSpec((tb, OUT_PAD), lambda i: (i, 0)),
        compiler_params=pltpu.CompilerParams(
            dimension_semantics=("parallel",)),   # v7x: shard batch tiles over both TCs
        cost_estimate=pl.CostEstimate(
            flops=flops,
            transcendentals=b_pad * OUT_PAD,
            bytes_accessed=bytes_accessed),
    )(x, w1, b1, w2, b2, w3, b3, w4, b4)
    return y[:B, :IMAGE_SIZE]


def ad_forward(ind, latents, prepared_params):
    # TODO(synk): the latent_vectors[ind] arbitrary-row gather stays in plain JAX;
    # it has no clean BlockSpec equivalent without per-row DMAs (tiny: B x 8 bytes).
    x = latents[ind]                                   # (B, z_dim)
    return decode_pallas(x, prepared_params)


def init_params(key, z_dim=2, data_shape=64, image_size=IMAGE_SIZE):
    """Deterministic xavier-normal-style init matching the module's shapes."""
    dims = [z_dim, 128, 256, 512, image_size]
    keys = jax.random.split(key, len(dims))            # 1 for latents, 4 for layers

    def xavier(k, fan_in, fan_out):
        std = jnp.sqrt(2.0 / (fan_in + fan_out))
        return jax.random.normal(k, (fan_in, fan_out), jnp.float32) * std

    latents = xavier(keys[0], data_shape, z_dim)        # (data_shape, z_dim)
    params = []
    for i in range(4):
        w = xavier(keys[i + 1], dims[i], dims[i + 1])   # (in, out)
        b = jnp.zeros((1, dims[i + 1]), jnp.float32)    # broadcastable bias row
        params.extend([w, b])
    return latents, tuple(params)


def _reference_forward_f32(ind, latents, params):
    w1, b1, w2, b2, w3, b3, w4, b4 = params
    h = latents[ind]
    h = jnp.maximum(h @ w1 + b1, 0.0)
    h = jnp.maximum(h @ w2 + b2, 0.0)
    h = jnp.maximum(h @ w3 + b3, 0.0)
    return jnp.tanh(h @ w4 + b4)


def _reference_forward_bf16(ind, latents, prepared_params):
    """Emulates the kernel's numerics (f32 layer-1 FMAs, bf16 MXU operands)."""
    w1, b1, w2, b2, w3, b3, w4, b4 = prepared_params
    h = latents[ind]
    h = jnp.maximum(h[:, 0:1] * w1[0:1, :] + h[:, 1:2] * w1[1:2, :] + b1, 0.0)
    h = jnp.maximum(jnp.dot(h.astype(jnp.bfloat16), w2,
                            preferred_element_type=jnp.float32) + b2, 0.0)
    h = jnp.maximum(jnp.dot(h.astype(jnp.bfloat16), w3,
                            preferred_element_type=jnp.float32) + b3, 0.0)
    y = jnp.dot(h.astype(jnp.bfloat16), w4,
                preferred_element_type=jnp.float32) + b4
    return jnp.tanh(y)[:, :IMAGE_SIZE]


if __name__ == "__main__":
    key = jax.random.PRNGKey(0)
    data_shape, z_dim, batch = 64, 2, 8

    latents, params = init_params(key, z_dim=z_dim, data_shape=data_shape)
    prepared = prepare_decoder_params(params)
    ind = jax.random.randint(jax.random.PRNGKey(1), (batch,), 0, data_shape)

    fwd = jax.jit(ad_forward)
    out = jax.block_until_ready(fwd(ind, latents, prepared))

    assert out.shape == (batch, IMAGE_SIZE), out.shape

    ref_bf16 = _reference_forward_bf16(ind, latents, prepared)
    ref_f32 = _reference_forward_f32(ind, latents, params)
    assert jnp.allclose(out, ref_bf16, atol=2e-3, rtol=0), (
        "kernel vs bf16 reference max|diff| =",
        float(jnp.max(jnp.abs(out - ref_bf16))))
    assert jnp.allclose(out, ref_f32, atol=5e-2, rtol=0), (
        "kernel vs f32 reference max|diff| =",
        float(jnp.max(jnp.abs(out - ref_f32))))
    print("KERNEL_OK")
</pallas_src>

<mosaic_0001>
module attributes {stable_mosaic.version = 11 : i64} {
  func.func @_decoder_kernel(%arg0: i32, %arg1: memref<8x2xf32, #tpu.memory_space<vmem>>, %arg2: memref<2x128xf32, #tpu.memory_space<vmem>>, %arg3: memref<1x128xf32, #tpu.memory_space<vmem>>, %arg4: memref<128x256xbf16, #tpu.memory_space<vmem>>, %arg5: memref<1x256xf32, #tpu.memory_space<vmem>>, %arg6: memref<256x512xbf16, #tpu.memory_space<vmem>>, %arg7: memref<1x512xf32, #tpu.memory_space<vmem>>, %arg8: memref<512x896xbf16, #tpu.memory_space<vmem>>, %arg9: memref<1x896xf32, #tpu.memory_space<vmem>>, %arg10: memref<8x896xf32, #tpu.memory_space<vmem>>) attributes {dimension_semantics = [#tpu.dimension_semantics<parallel>], iteration_bounds = array<i64: 1>, scalar_prefetch = 0 : i64, scratch_operands = 0 : i64, tpu.core_type = #tpu.core_type<tc>, window_params = [{transform_indices = @transform_0, window_bounds = array<i64: 8, 2>}, {pipeline_mode = #tpu.pipeline_mode<synchronous>, transform_indices = @transform_1, window_bounds = array<i64: 2, 128>}, {pipeline_mode = #tpu.pipeline_mode<synchronous>, transform_indices = @transform_2, window_bounds = array<i64: 1, 128>}, {pipeline_mode = #tpu.pipeline_mode<synchronous>, transform_indices = @transform_3, window_bounds = array<i64: 128, 256>}, {pipeline_mode = #tpu.pipeline_mode<synchronous>, transform_indices = @transform_4, window_bounds = array<i64: 1, 256>}, {pipeline_mode = #tpu.pipeline_mode<synchronous>, transform_indices = @transform_5, window_bounds = array<i64: 256, 512>}, {pipeline_mode = #tpu.pipeline_mode<synchronous>, transform_indices = @transform_6, window_bounds = array<i64: 1, 512>}, {pipeline_mode = #tpu.pipeline_mode<synchronous>, transform_indices = @transform_7, window_bounds = array<i64: 512, 896>}, {pipeline_mode = #tpu.pipeline_mode<synchronous>, transform_indices = @transform_8, window_bounds = array<i64: 1, 896>}, {transform_indices = @transform_9, window_bounds = array<i64: 8, 896>}]} {
    %c0 = arith.constant 0 : index
    %c0_0 = arith.constant 0 : index
    %0 = vector.load %arg1[%c0, %c0_0] : memref<8x2xf32, #tpu.memory_space<vmem>>, vector<8x2xf32>
    %1 = vector.extract_strided_slice %0 {offsets = [0, 0], sizes = [8, 1], strides = [1, 1]} : vector<8x2xf32> to vector<8x1xf32>
    %c0_1 = arith.constant 0 : index
    %c0_2 = arith.constant 0 : index
    %2 = vector.load %arg2[%c0_1, %c0_2] : memref<2x128xf32, #tpu.memory_space<vmem>>, vector<1x128xf32>
    %3 = vector.broadcast %1 : vector<8x1xf32> to vector<8x128xf32>
    %4 = vector.broadcast %2 : vector<1x128xf32> to vector<8x128xf32>
    %5 = arith.mulf %3, %4 : vector<8x128xf32>
    %6 = vector.extract_strided_slice %0 {offsets = [0, 1], sizes = [8, 1], strides = [1, 1]} : vector<8x2xf32> to vector<8x1xf32>
    %c1 = arith.constant 1 : index
    %c0_3 = arith.constant 0 : index
    %7 = vector.load %arg2[%c1, %c0_3] : memref<2x128xf32, #tpu.memory_space<vmem>>, vector<1x128xf32>
    %8 = vector.broadcast %6 : vector<8x1xf32> to vector<8x128xf32>
    %9 = vector.broadcast %7 : vector<1x128xf32> to vector<8x128xf32>
    %10 = arith.mulf %8, %9 : vector<8x128xf32>
    %11 = arith.addf %5, %10 : vector<8x128xf32>
    %c0_4 = arith.constant 0 : index
    %c0_5 = arith.constant 0 : index
    %12 = vector.load %arg3[%c0_4, %c0_5] : memref<1x128xf32, #tpu.memory_space<vmem>>, vector<1x128xf32>
    %13 = vector.broadcast %12 : vector<1x128xf32> to vector<8x128xf32>
    %14 = arith.addf %11, %13 : vector<8x128xf32>
    %cst = arith.constant 0.000000e+00 : f32
    %15 = vector.broadcast %cst : f32 to vector<8x128xf32>
    %16 = arith.maximumf %14, %15 : vector<8x128xf32>
    %17 = arith.truncf %16 : vector<8x128xf32> to vector<8x128xbf16>
    %c0_6 = arith.constant 0 : index
    %c0_7 = arith.constant 0 : index
    %18 = vector.load %arg4[%c0_6, %c0_7] : memref<128x256xbf16, #tpu.memory_space<vmem>>, vector<128x256xbf16>
    %cst_8 = arith.constant dense<0.000000e+00> : vector<8x256xf32>
    %19 = tpu.matmul %17, %18, %cst_8 {dimension_numbers = #tpu.dot_dimension_numbers<[1], [0], [0], [1], [0, 0, 1, 1], [], []>} : vector<8x128xbf16>, vector<128x256xbf16>, vector<8x256xf32> -> vector<8x256xf32>
    %c0_9 = arith.constant 0 : index
    %c0_10 = arith.constant 0 : index
    %20 = vector.load %arg5[%c0_9, %c0_10] : memref<1x256xf32, #tpu.memory_space<vmem>>, vector<1x256xf32>
    %21 = vector.broadcast %20 : vector<1x256xf32> to vector<8x256xf32>
    %22 = arith.addf %19, %21 : vector<8x256xf32>
    %cst_11 = arith.constant 0.000000e+00 : f32
    %23 = vector.broadcast %cst_11 : f32 to vector<8x256xf32>
    %24 = arith.maximumf %22, %23 : vector<8x256xf32>
    %25 = arith.truncf %24 : vector<8x256xf32> to vector<8x256xbf16>
    %c0_12 = arith.constant 0 : index
    %c0_13 = arith.constant 0 : index
    %26 = vector.load %arg6[%c0_12, %c0_13] : memref<256x512xbf16, #tpu.memory_space<vmem>>, vector<256x512xbf16>
    %cst_14 = arith.constant dense<0.000000e+00> : vector<8x512xf32>
    %27 = tpu.matmul %25, %26, %cst_14 {dimension_numbers = #tpu.dot_dimension_numbers<[1], [0], [0], [1], [0, 0, 1, 1], [], []>} : vector<8x256xbf16>, vector<256x512xbf16>, vector<8x512xf32> -> vector<8x512xf32>
    %c0_15 = arith.constant 0 : index
    %c0_16 = arith.constant 0 : index
    %28 = vector.load %arg7[%c0_15, %c0_16] : memref<1x512xf32, #tpu.memory_space<vmem>>, vector<1x512xf32>
    %29 = vector.broadcast %28 : vector<1x512xf32> to vector<8x512xf32>
    %30 = arith.addf %27, %29 : vector<8x512xf32>
    %cst_17 = arith.constant 0.000000e+00 : f32
    %31 = vector.broadcast %cst_17 : f32 to vector<8x512xf32>
    %32 = arith.maximumf %30, %31 : vector<8x512xf32>
    %33 = arith.truncf %32 : vector<8x512xf32> to vector<8x512xbf16>
    %c0_18 = arith.constant 0 : index
    %c0_19 = arith.constant 0 : index
    %34 = vector.load %arg8[%c0_18, %c0_19] : memref<512x896xbf16, #tpu.memory_space<vmem>>, vector<512x896xbf16>
    %cst_20 = arith.constant dense<0.000000e+00> : vector<8x896xf32>
    %35 = tpu.matmul %33, %34, %cst_20 {dimension_numbers = #tpu.dot_dimension_numbers<[1], [0], [0], [1], [0, 0, 1, 1], [], []>} : vector<8x512xbf16>, vector<512x896xbf16>, vector<8x896xf32> -> vector<8x896xf32>
    %c0_21 = arith.constant 0 : index
    %c0_22 = arith.constant 0 : index
    %36 = vector.load %arg9[%c0_21, %c0_22] : memref<1x896xf32, #tpu.memory_space<vmem>>, vector<1x896xf32>
    %37 = vector.broadcast %36 : vector<1x896xf32> to vector<8x896xf32>
    %38 = arith.addf %35, %37 : vector<8x896xf32>
    %39 = math.tanh %38 : vector<8x896xf32>
    %c0_23 = arith.constant 0 : index
    %c0_24 = arith.constant 0 : index
    %40 = vector.load %arg10[%c0_23, %c0_24] : memref<8x896xf32, #tpu.memory_space<vmem>>, vector<8x896xf32>
    tpu.vector_store %arg10[%c0_23, %c0_24], %39 {strides = array<i32>} : memref<8x896xf32, #tpu.memory_space<vmem>>, vector<8x896xf32>,
    return
  }
  func.func @transform_0(%arg0: i32) -> (i32, i32) {
    %c0_i32 = arith.constant 0 : i32
    %c0_i32_0 = arith.constant 0 : i32
    return %arg0, %c0_i32 : i32, i32
  }
  func.func @transform_1(%arg0: i32) -> (i32, i32) {
    %c0_i32 = arith.constant 0 : i32
    %c0_i32_0 = arith.constant 0 : i32
    %c0_i32_1 = arith.constant 0 : i32
    return %c0_i32, %c0_i32_0 : i32, i32
  }
  func.func @transform_2(%arg0: i32) -> (i32, i32) {
    %c0_i32 = arith.constant 0 : i32
    %c0_i32_0 = arith.constant 0 : i32
    %c0_i32_1 = arith.constant 0 : i32
    return %c0_i32, %c0_i32_0 : i32, i32
  }
  func.func @transform_3(%arg0: i32) -> (i32, i32) {
    %c0_i32 = arith.constant 0 : i32
    %c0_i32_0 = arith.constant 0 : i32
    %c0_i32_1 = arith.constant 0 : i32
    return %c0_i32, %c0_i32_0 : i32, i32
  }
  func.func @transform_4(%arg0: i32) -> (i32, i32) {
    %c0_i32 = arith.constant 0 : i32
    %c0_i32_0 = arith.constant 0 : i32
    %c0_i32_1 = arith.constant 0 : i32
    return %c0_i32, %c0_i32_0 : i32, i32
  }
  func.func @transform_5(%arg0: i32) -> (i32, i32) {
    %c0_i32 = arith.constant 0 : i32
    %c0_i32_0 = arith.constant 0 : i32
    %c0_i32_1 = arith.constant 0 : i32
    return %c0_i32, %c0_i32_0 : i32, i32
  }
  func.func @transform_6(%arg0: i32) -> (i32, i32) {
    %c0_i32 = arith.constant 0 : i32
    %c0_i32_0 = arith.constant 0 : i32
    %c0_i32_1 = arith.constant 0 : i32
    return %c0_i32, %c0_i32_0 : i32, i32
  }
  func.func @transform_7(%arg0: i32) -> (i32, i32) {
    %c0_i32 = arith.constant 0 : i32
    %c0_i32_0 = arith.constant 0 : i32
    %c0_i32_1 = arith.constant 0 : i32
    return %c0_i32, %c0_i32_0 : i32, i32
  }
  func.func @transform_8(%arg0: i32) -> (i32, i32) {
    %c0_i32 = arith.constant 0 : i32
    %c0_i32_0 = arith.constant 0 : i32
    %c0_i32_1 = arith.constant 0 : i32
    return %c0_i32, %c0_i32_0 : i32, i32
  }
  func.func @transform_9(%arg0: i32) -> (i32, i32) {
    %c0_i32 = arith.constant 0 : i32
    %c0_i32_0 = arith.constant 0 : i32
    return %arg0, %c0_i32 : i32, i32
  }
}

</mosaic_0001>

<llo_original>
// kernel: ad_forward.1
$region0: #{ad_forward.1}
  #allocation0 [shape = 'u32[]', space=smem, size = 0x4, offset = 0x4, fixed_abs, tag = 'smem constant byte address 0x4 - core index']
  #allocation1 [shape = 'u32[144,128]{1,0:T(1,128)}', space=vmem, size = 0x12000, scoped, tag = 'internal scratch']
  %s0 = inlined_call_operand.vmem [shape: f32[8,2], index: 0, kind: input, shape index: {}]
  %s1 = inlined_call_operand.vmem [shape: f32[2,128], index: 1, kind: input, shape index: {}]
  %s2 = inlined_call_operand.vmem [shape: f32[1,128], index: 2, kind: input, shape index: {}]
  %s3 = inlined_call_operand.vmem [shape: bf16[128,256], index: 3, kind: input, shape index: {}]
  %s4 = inlined_call_operand.vmem [shape: f32[1,256], index: 4, kind: input, shape index: {}]
  %s5 = inlined_call_operand.hbm [shape: bf16[256,512], index: 5, kind: input, shape index: {}]
  %s6 = inlined_call_operand.vmem [shape: f32[1,512], index: 6, kind: input, shape index: {}]
  %s7 = inlined_call_operand.hbm [shape: bf16[512,896], index: 7, kind: input, shape index: {}]
  %s8 = inlined_call_operand.vmem [shape: f32[1,896], index: 8, kind: input, shape index: {}]
  %s9 = inlined_call_operand.hbm [shape: f32[8,896], index: 9, kind: output, shape index: {}]
  %s10 = sld [smem:[#allocation0]]
  $region54: #{ad_forward.1} parent=0
    _
  %s12 = ssub.s32 1, %s10
  %s13 = scalar_select 0, %s12, %s10
  $region1: #{ad_forward.1} parent=0
    #allocation2 [shape = 'u8[262144]{0}', space=vmem, size = 0x40000, scoped, tag = 'input window, operand 5, single buffered']
    #allocation3 [shape = 's32[1]{0}', space=sflag, size = 0x4, scoped, tag = 'scoped memory for ad_forward.1']
    #allocation4 [shape = 's32[1]{0}', space=sflag, size = 0x4, scoped, tag = 'scoped memory for ad_forward.1']
    #allocation5 [shape = 'u8[917504]{0}', space=vmem, size = 0xe0000, scoped, tag = 'input window, operand 7, single buffered']
    #allocation6 [shape = 's32[1]{0}', space=sflag, size = 0x4, scoped, tag = 'scoped memory for ad_forward.1']
    #allocation7 [shape = 'u8[28672]{0}', space=vmem, size = 0x7000, scoped, tag = 'output window, operand 0, single buffered']
    %14 = vsyncpa [#allocation3], 0
    %15 = vsyncpa [#allocation6], 0
    %16 = vsyncpa [#allocation4], 0
    // Predicated region
    $region2: #{ad_forward.1} parent=1 // pred_check
      _
    $region3: #{ad_forward.1} parent=1 // pred_check_branch
      %18 = sbr.rel (0) target = $region5
    $region4: #{ad_forward.1} parent=1 // pred_region
      _
    $region5: #{ad_forward.1} parent=1 // pred_fallthru
      _
    // Predicated region
    $region6: #{ad_forward.1} parent=1 // pred_check
      _
    $region7: #{ad_forward.1} parent=1 // pred_check_branch
      %20 = sbr.rel (0) target = $region9
    $region8: #{ad_forward.1} parent=1 // pred_region
      _
    $region9: #{ad_forward.1} parent=1 // pred_fallthru
      _
    // Predicated region
    $region10: #{ad_forward.1} parent=1 // pred_check
      _
    $region11: #{ad_forward.1} parent=1 // pred_check_branch
      %22 = sbr.rel (0) target = $region13
    $region12: #{ad_forward.1} parent=1 // pred_region
      _
    $region13: #{ad_forward.1} parent=1 // pred_fallthru
      _
    // Predicated region
    $region14: #{ad_forward.1} parent=1 // pred_check
      _
    $region15: #{ad_forward.1} parent=1 // pred_check_branch
      %24 = sbr.rel (0) target = $region17
    $region16: #{ad_forward.1} parent=1 // pred_region
      _
    $region17: #{ad_forward.1} parent=1 // pred_fallthru
      _
    // Predicated region
    $region18: #{ad_forward.1} parent=1 // pred_check
      _
    $region19: #{ad_forward.1} parent=1 // pred_check_branch
      %26 = sbr.rel (0) target = $region21
    $region20: #{ad_forward.1} parent=1 // pred_region
      _
    $region21: #{ad_forward.1} parent=1 // pred_fallthru
      _
    // Predicated region
    $region22: #{ad_forward.1} parent=1 // pred_check
      _
    $region23: #{ad_forward.1} parent=1 // pred_check_branch
      %28 = sbr.rel (0) target = $region25
    $region24: #{ad_forward.1} parent=1 // pred_region
      %s30 = ssub.s32 8192, 8192
      %31 = vsyncadd [#allocation3], %s30
      %s32 = sshll.u32 [#allocation2], 4
      %s33 = int_to_ptr.vmem [resolvable:$true] %s32
      %38 = dma.hbm_to_vmem [thread:$0]  %s5, 8192, %s33, [#allocation3], 256, 256, 16
    $region25: #{ad_forward.1} parent=1 // pred_fallthru
      _
    // Predicated region
    $region26: #{ad_forward.1} parent=1 // pred_check
      _
    $region27: #{ad_forward.1} parent=1 // pred_check_branch
      %40 = sbr.rel (0) target = $region29
    $region28: #{ad_forward.1} parent=1 // pred_region
      _
    $region29: #{ad_forward.1} parent=1 // pred_fallthru
      _
    // Predicated region
    $region30: #{ad_forward.1} parent=1 // pred_check
      _
    $region31: #{ad_forward.1} parent=1 // pred_check_branch
      %42 = sbr.rel (0) target = $region33
    $region32: #{ad_forward.1} parent=1 // pred_region
      %s44 = ssub.s32 28672, 28672
      %45 = vsyncadd [#allocation6], %s44
      %s46 = sshll.u32 [#allocation5], 4
      %s47 = int_to_ptr.vmem [resolvable:$true] %s46
      %52 = dma.hbm_to_vmem [thread:$0]  %s7, 28672, %s47, [#allocation6], 448, 448, 28
    $region33: #{ad_forward.1} parent=1 // pred_fallthru
      _
    // Predicated region
    $region34: #{ad_forward.1} parent=1 // pred_check
      _
    $region35: #{ad_forward.1} parent=1 // pred_check_branch
      %54 = sbr.rel (0) target = $region37
    $region36: #{ad_forward.1} parent=1 // pred_region
      _
    $region37: #{ad_forward.1} parent=1 // pred_fallthru
      _
    // Predicated region
    $region38: #{ad_forward.1} parent=1 // pred_check
      _
    $region39: #{ad_forward.1} parent=1 // pred_check_branch
      %56 = sbr.rel (0) target = $region41
    $region40: #{ad_forward.1} parent=1 // pred_region
      %57 = dma.done [#allocation3], 8192
    $region41: #{ad_forward.1} parent=1 // pred_fallthru
      _
    // Predicated region
    $region42: #{ad_forward.1} parent=1 // pred_check
      _
    $region43: #{ad_forward.1} parent=1 // pred_check_branch
      %59 = sbr.rel (0) target = $region45
    $region44: #{ad_forward.1} parent=1 // pred_region
      %60 = dma.done [#allocation6], 28672
    $region45: #{ad_forward.1} parent=1 // pred_fallthru
      _
    %v62 = vld [vmem:[%s0] sm:$0xff]
    %v63 = vld [vmem:[%s1] sm:$0x1]
    %65 = vset.pattern.permute.xlu0 0
    %66 = vperm.xlu0 %65, %v62
    %v67 = vpop.permute.xlu0 %66
    %v69 = vlaneseq
    %v70 = vshrl.u32 %v69, 7
    %v71 = vsub.s32 0, %v70
    %v72 = vrot.slane %v63, %v71
    %v73 = vmul.f32 %v67, %v72
    %v74 = vld [vmem:[%s1 + $0x1] sm:$0x1]
    %75 = vset.pattern.permute.xlu0 1
    %76 = vperm.xlu0 %75, %v62
    %v77 = vpop.permute.xlu0 %76
    %v79 = vlaneseq
    %v80 = vshrl.u32 %v79, 7
    %v81 = vsub.s32 0, %v80
    %v82 = vrot.slane %v74, %v81
    %v83 = vmul.f32 %v77, %v82
    %v84 = vadd.f32 %v73, %v83
    %v85 = vld [vmem:[%s2] sm:$0x1]
    %v87 = vlaneseq
    %v88 = vshrl.u32 %v87, 7
    %v89 = vsub.s32 0, %v88
    %v90 = vrot.slane %v85, %v89
    %v92 = vadd.f32 %v84, %v90
    %v93 = vmax.f32 %v92, 0.0
    %v94 = vpack.c.bf16 %v93, %v93
    %v95 = vld [vmem:[%s3] sm:$0xff]
    %v96 = vld [vmem:[%s3 + $0x8] sm:$0xff]
    %v97 = vld [vmem:[%s3 + $0x10] sm:$0xff]
    %v98 = vld [vmem:[%s3 + $0x18] sm:$0xff]
    %v99 = vld [vmem:[%s3 + $0x20] sm:$0xff]
    %v100 = vld [vmem:[%s3 + $0x28] sm:$0xff]
    %v101 = vld [vmem:[%s3 + $0x30] sm:$0xff]
    %v102 = vld [vmem:[%s3 + $0x38] sm:$0xff]
    %v103 = vld [vmem:[%s3 + $0x40] sm:$0xff]
    %v104 = vld [vmem:[%s3 + $0x48] sm:$0xff]
    %v105 = vld [vmem:[%s3 + $0x50] sm:$0xff]
    %v106 = vld [vmem:[%s3 + $0x58] sm:$0xff]
    %v107 = vld [vmem:[%s3 + $0x60] sm:$0xff]
    %v108 = vld [vmem:[%s3 + $0x68] sm:$0xff]
    %v109 = vld [vmem:[%s3 + $0x70] sm:$0xff]
    %v110 = vld [vmem:[%s3 + $0x78] sm:$0xff]
    %v111 = vld [vmem:[%s4] sm:$0x3]
    %v113 = vlaneseq
    %v114 = vshrl.u32 %v113, 7
    %v115 = vsub.s32 0, %v114
    %v116 = vrot.slane %v111, %v115
    %v117 = vlaneseq
    %v118 = vshrl.u32 %v117, 7
    %v119 = vsub.s32 1, %v118
    %v120 = vrot.slane %v111, %v119
    %v139 = vunpack.c.l.b16 %v95
    %v140 = vunpack.c.h.b16 %v95
    %v141 = vunpack.c.l.b16 %v96
    %v142 = vunpack.c.h.b16 %v96
    %v143 = vunpack.c.l.b16 %v97
    %v144 = vunpack.c.h.b16 %v97
    %v145 = vunpack.c.l.b16 %v98
    %v146 = vunpack.c.h.b16 %v98
    %v147 = vunpack.c.l.b16 %v99
    %v148 = vunpack.c.h.b16 %v99
    %v149 = vunpack.c.l.b16 %v100
    %v150 = vunpack.c.h.b16 %v100
    %v151 = vunpack.c.l.b16 %v101
    %v152 = vunpack.c.h.b16 %v101
    %v153 = vunpack.c.l.b16 %v102
    %v154 = vunpack.c.h.b16 %v102
    %v155 = vunpack.c.l.b16 %v103
    %v156 = vunpack.c.h.b16 %v103
    %v157 = vunpack.c.l.b16 %v104
    %v158 = vunpack.c.h.b16 %v104
    %v159 = vunpack.c.l.b16 %v105
    %v160 = vunpack.c.h.b16 %v105
    %v161 = vunpack.c.l.b16 %v106
    %v162 = vunpack.c.h.b16 %v106
    %v163 = vunpack.c.l.b16 %v107
    %v164 = vunpack.c.h.b16 %v107
    %v165 = vunpack.c.l.b16 %v108
    %v166 = vunpack.c.h.b16 %v108
    %v167 = vunpack.c.l.b16 %v109
    %v168 = vunpack.c.h.b16 %v109
    %v169 = vunpack.c.l.b16 %v110
    %v170 = vunpack.c.h.b16 %v110
    %v171 = vpack.c.b16 %v141, %v139
    %v172 = vpack.c.b16 %v142, %v140
    %v173 = vpack.c.b16 %v145, %v143
    %v174 = vpack.c.b16 %v146, %v144
    %v175 = vpack.c.b16 %v149, %v147
    %v176 = vpack.c.b16 %v150, %v148
    %v177 = vpack.c.b16 %v153, %v151
    %v178 = vpack.c.b16 %v154, %v152
    %v179 = vpack.c.b16 %v157, %v155
    %v180 = vpack.c.b16 %v158, %v156
    %v181 = vpack.c.b16 %v161, %v159
    %v182 = vpack.c.b16 %v162, %v160
    %v183 = vpack.c.b16 %v165, %v163
    %v184 = vpack.c.b16 %v166, %v164
    %v185 = vpack.c.b16 %v169, %v167
    %v186 = vpack.c.b16 %v170, %v168
    %203 = vmatprep.subr.bf16.mxu0 %v172
    %204 = vmatpush1.bf16.msra.mxu0 %v171
    %205 = vmatprep.subr.bf16.mxu0 %v174
    %206 = vmatpush1.bf16.msra.mxu0 %v173
    %207 = vmatprep.subr.bf16.mxu0 %v176
    %208 = vmatpush1.bf16.msra.mxu0 %v175
    %209 = vmatprep.subr.bf16.mxu0 %v178
    %210 = vmatpush1.bf16.msra.mxu0 %v177
    %211 = vmatprep.subr.bf16.mxu0 %v180
    %212 = vmatpush1.bf16.msra.mxu0 %v179
    %213 = vmatprep.subr.bf16.mxu0 %v182
    %214 = vmatpush1.bf16.msra.mxu0 %v181
    %215 = vmatprep.subr.bf16.mxu0 %v184
    %216 = vmatpush1.bf16.msra.mxu0 %v183
    %217 = vmatprep.subr.bf16.mxu0 %v186
    %218 = vmatpush1.bf16.msra.mxu0 %v185
    %219 = vmatprep.subr.bf16.mxu0 0
    %220 = vmatpush1.bf16.msra.mxu0 0
    %221 = vmatprep.subr.bf16.mxu0 0
    %222 = vmatpush1.bf16.msra.mxu0 0
    %223 = vmatprep.subr.bf16.mxu0 0
    %224 = vmatpush1.bf16.msra.mxu0 0
    %225 = vmatprep.subr.bf16.mxu0 0
    %226 = vmatpush1.bf16.msra.mxu0 0
    %227 = vmatprep.subr.bf16.mxu0 0
    %228 = vmatpush1.bf16.msra.mxu0 0
    %229 = vmatprep.subr.bf16.mxu0 0
    %230 = vmatpush1.bf16.msra.mxu0 0
    %231 = vmatprep.subr.bf16.mxu0 0
    %232 = vmatpush1.bf16.msra.mxu0 0
    %233 = vmatprep.subr.bf16.mxu0 0
    %234 = vmatpush1.bf16.msra.mxu0 0
    %235 = vmatprep.mubr.bf16.mxu0 0
    %236 = vmatmul.mubr.bf16.gmra.mrb[0].mxu0 %v94
    %v237 = vpop.f32.mrb[0].mxu0
    %v238 = vadd.f32 %v116, %v237
    %v239 = vpop.f32.mrb[0].mxu0
    %v240 = vadd.f32 %v120, %v239
    %v241 = vpop.f32.mrb[0].mxu0
    %v242 = vpop.f32.mrb[0].mxu0
    %243 = vdwg.mxu0
    %v244 = vmax.f32 %v238, 0.0
    %v245 = vmax.f32 %v240, 0.0
    %v246 = vpack.c.bf16 %v244, %v244
    %v247 = vpack.c.bf16 %v245, %v245
    %v248 = vld [vmem:[#allocation2] sm:$0xff]
    %v249 = vld [vmem:[#allocation2 + $0x8] sm:$0xff]
    %v250 = vld [vmem:[#allocation2 + $0x10] sm:$0xff]
    %v251 = vld [vmem:[#allocation2 + $0x18] sm:$0xff]
    %v252 = vld [vmem:[#allocation2 + $0x20] sm:$0xff]
    %v253 = vld [vmem:[#allocation2 + $0x28] sm:$0xff]
    %v254 = vld [vmem:[#allocation2 + $0x30] sm:$0xff]
    %v255 = vld [vmem:[#allocation2 + $0x38] sm:$0xff]
    %v256 = vld [vmem:[#allocation2 + $0x40] sm:$0xff]
    %v257 = vld [vmem:[#allocation2 + $0x48] sm:$0xff]
    %v258 = vld [vmem:[#allocation2 + $0x50] sm:$0xff]
    %v259 = vld [vmem:[#allocation2 + $0x58] sm:$0xff]
    %v260 = vld [vmem:[#allocation2 + $0x60] sm:$0xff]
    %v261 = vld [vmem:[#allocation2 + $0x68] sm:$0xff]
    %v262 = vld [vmem:[#allocation2 + $0x70] sm:$0xff]
    %v263 = vld [vmem:[#allocation2 + $0x78] sm:$0xff]
    %v264 = vld [vmem:[#allocation2 + $0x80] sm:$0xff]
    %v265 = vld [vmem:[#allocation2 + $0x88] sm:$0xff]
    %v266 = vld [vmem:[#allocation2 + $0x90] sm:$0xff]
    %v267 = vld [vmem:[#allocation2 + $0x98] sm:$0xff]
    %v268 = vld [vmem:[#allocation2 + $0xa0] sm:$0xff]
    %v269 = vld [vmem:[#allocation2 + $0xa8] sm:$0xff]
    %v270 = vld [vmem:[#allocation2 + $0xb0] sm:$0xff]
    %v271 = vld [vmem:[#allocation2 + $0xb8] sm:$0xff]
    %v272 = vld [vmem:[#allocation2 + $0xc0] sm:$0xff]
    %v273 = vld [vmem:[#allocation2 + $0xc8] sm:$0xff]
    %v274 = vld [vmem:[#allocation2 + $0xd0] sm:$0xff]
    %v275 = vld [vmem:[#allocation2 + $0xd8] sm:$0xff]
    %v276 = vld [vmem:[#allocation2 + $0xe0] sm:$0xff]
    %v277 = vld [vmem:[#allocation2 + $0xe8] sm:$0xff]
    %v278 = vld [vmem:[#allocation2 + $0xf0] sm:$0xff]
    %v279 = vld [vmem:[#allocation2 + $0xf8] sm:$0xff]
    %v280 = vld [vmem:[#allocation2 + $0x100] sm:$0xff]
    %v281 = vld [vmem:[#allocation2 + $0x108] sm:$0xff]
    %v282 = vld [vmem:[#allocation2 + $0x110] sm:$0xff]
    %v283 = vld [vmem:[#allocation2 + $0x118] sm:$0xff]
    %v284 = vld [vmem:[#allocation2 + $0x120] sm:$0xff]
    %v285 = vld [vmem:[#allocation2 + $0x128] sm:$0xff]
    %v286 = vld [vmem:[#allocation2 + $0x130] sm:$0xff]
    %v287 = vld [vmem:[#allocation2 + $0x138] sm:$0xff]
    %v288 = vld [vmem:[#allocation2 + $0x140] sm:$0xff]
    %v289 = vld [vmem:[#allocation2 + $0x148] sm:$0xff]
    %v290 = vld [vmem:[#allocation2 + $0x150] sm:$0xff]
    %v291 = vld [vmem:[#allocation2 + $0x158] sm:$0xff]
    %v292 = vld [vmem:[#allocation2 + $0x160] sm:$0xff]
    %v293 = vld [vmem:[#allocation2 + $0x168] sm:$0xff]
    %v294 = vld [vmem:[#allocation2 + $0x170] sm:$0xff]
    %v295 = vld [vmem:[#allocation2 + $0x178] sm:$0xff]
    %v296 = vld [vmem:[#allocation2 + $0x180] sm:$0xff]
    %v297 = vld [vmem:[#allocation2 + $0x188] sm:$0xff]
    %v298 = vld [vmem:[#allocation2 + $0x190] sm:$0xff]
    %v299 = vld [vmem:[#allocation2 + $0x198] sm:$0xff]
    %v300 = vld [vmem:[#allocation2 + $0x1a0] sm:$0xff]
    %v301 = vld [vmem:[#allocation2 + $0x1a8] sm:$0xff]
    %v302 = vld [vmem:[#allocation2 + $0x1b0] sm:$0xff]
    %v303 = vld [vmem:[#allocation2 + $0x1b8] sm:$0xff]
    %v304 = vld [vmem:[#allocation2 + $0x1c0] sm:$0xff]
    %v305 = vld [vmem:[#allocation2 + $0x1c8] sm:$0xff]
    %v306 = vld [vmem:[#allocation2 + $0x1d0] sm:$0xff]
    %v307 = vld [vmem:[#allocation2 + $0x1d8] sm:$0xff]
    %v308 = vld [vmem:[#allocation2 + $0x1e0] sm:$0xff]
    %v309 = vld [vmem:[#allocation2 + $0x1e8] sm:$0xff]
    %v310 = vld [vmem:[#allocation2 + $0x1f0] sm:$0xff]
    %v311 = vld [vmem:[#allocation2 + $0x1f8] sm:$0xff]
    %v312 = vld [vmem:[%s6] sm:$0xf]
    %v314 = vlaneseq
    %v315 = vshrl.u32 %v314, 7
    %v316 = vsub.s32 0, %v315
    %v317 = vrot.slane %v312, %v316
    %v318 = vlaneseq
    %v319 = vshrl.u32 %v318, 7
    %v320 = vsub.s32 1, %v319
    %v321 = vrot.slane %v312, %v320
    %v322 = vlaneseq
    %v323 = vshrl.u32 %v322, 7
    %v324 = vsub.s32 2, %v323
    %v325 = vrot.slane %v312, %v324
    %v326 = vlaneseq
    %v327 = vshrl.u32 %v326, 7
    %v328 = vsub.s32 3, %v327
    %v329 = vrot.slane %v312, %v328
    %v398 = vunpack.c.l.b16 %v248
    %v399 = vunpack.c.h.b16 %v248
    %v400 = vunpack.c.l.b16 %v249
    %v401 = vunpack.c.h.b16 %v249
    %v402 = vunpack.c.l.b16 %v250
    %v403 = vunpack.c.h.b16 %v250
    %v404 = vunpack.c.l.b16 %v251
    %v405 = vunpack.c.h.b16 %v251
    %v406 = vunpack.c.l.b16 %v252
    %v407 = vunpack.c.h.b16 %v252
    %v408 = vunpack.c.l.b16 %v253
    %v409 = vunpack.c.h.b16 %v253
    %v410 = vunpack.c.l.b16 %v254
    %v411 = vunpack.c.h.b16 %v254
    %v412 = vunpack.c.l.b16 %v255
    %v413 = vunpack.c.h.b16 %v255
    %v414 = vunpack.c.l.b16 %v256
    %v415 = vunpack.c.h.b16 %v256
    %v416 = vunpack.c.l.b16 %v257
    %v417 = vunpack.c.h.b16 %v257
    %v418 = vunpack.c.l.b16 %v258
    %v419 = vunpack.c.h.b16 %v258
    %v420 = vunpack.c.l.b16 %v259
    %v421 = vunpack.c.h.b16 %v259
    %v422 = vunpack.c.l.b16 %v260
    %v423 = vunpack.c.h.b16 %v260
    %v424 = vunpack.c.l.b16 %v261
    %v425 = vunpack.c.h.b16 %v261
    %v426 = vunpack.c.l.b16 %v262
    %v427 = vunpack.c.h.b16 %v262
    %v428 = vunpack.c.l.b16 %v263
    %v429 = vunpack.c.h.b16 %v263
    %v430 = vunpack.c.l.b16 %v264
    %v431 = vunpack.c.h.b16 %v264
    %v432 = vunpack.c.l.b16 %v265
    %v433 = vunpack.c.h.b16 %v265
    %v434 = vunpack.c.l.b16 %v266
    %v435 = vunpack.c.h.b16 %v266
    %v436 = vunpack.c.l.b16 %v267
    %v437 = vunpack.c.h.b16 %v267
    %v438 = vunpack.c.l.b16 %v268
    %v439 = vunpack.c.h.b16 %v268
    %v440 = vunpack.c.l.b16 %v269
    %v441 = vunpack.c.h.b16 %v269
    %v442 = vunpack.c.l.b16 %v270
    %v443 = vunpack.c.h.b16 %v270
    %v444 = vunpack.c.l.b16 %v271
    %v445 = vunpack.c.h.b16 %v271
    %v446 = vunpack.c.l.b16 %v272
    %v447 = vunpack.c.h.b16 %v272
    %v448 = vunpack.c.l.b16 %v273
    %v449 = vunpack.c.h.b16 %v273
    %v450 = vunpack.c.l.b16 %v274
    %v451 = vunpack.c.h.b16 %v274
    %v452 = vunpack.c.l.b16 %v275
    %v453 = vunpack.c.h.b16 %v275
    %v454 = vunpack.c.l.b16 %v276
    %v455 = vunpack.c.h.b16 %v276
    %v456 = vunpack.c.l.b16 %v277
    %v457 = vunpack.c.h.b16 %v277
    %v458 = vunpack.c.l.b16 %v278
    %v459 = vunpack.c.h.b16 %v278
    %v460 = vunpack.c.l.b16 %v279
    %v461 = vunpack.c.h.b16 %v279
    %v462 = vunpack.c.l.b16 %v280
    %v463 = vunpack.c.h.b16 %v280
    %v464 = vunpack.c.l.b16 %v281
    %v465 = vunpack.c.h.b16 %v281
    %v466 = vunpack.c.l.b16 %v282
    %v467 = vunpack.c.h.b16 %v282
    %v468 = vunpack.c.l.b16 %v283
    %v469 = vunpack.c.h.b16 %v283
    %v470 = vunpack.c.l.b16 %v284
    %v471 = vunpack.c.h.b16 %v284
    %v472 = vunpack.c.l.b16 %v285
    %v473 = vunpack.c.h.b16 %v285
    %v474 = vunpack.c.l.b16 %v286
    %v475 = vunpack.c.h.b16 %v286
    %v476 = vunpack.c.l.b16 %v287
    %v477 = vunpack.c.h.b16 %v287
    %v478 = vunpack.c.l.b16 %v288
    %v479 = vunpack.c.h.b16 %v288
    %v480 = vunpack.c.l.b16 %v289
    %v481 = vunpack.c.h.b16 %v289
    %v482 = vunpack.c.l.b16 %v290
    %v483 = vunpack.c.h.b16 %v290
    %v484 = vunpack.c.l.b16 %v291
    %v485 = vunpack.c.h.b16 %v291
    %v486 = vunpack.c.l.b16 %v292
    %v487 = vunpack.c.h.b16 %v292
    %v488 = vunpack.c.l.b16 %v293
    %v489 = vunpack.c.h.b16 %v293
    %v490 = vunpack.c.l.b16 %v294
    %v491 = vunpack.c.h.b16 %v294
    %v492 = vunpack.c.l.b16 %v295
    %v493 = vunpack.c.h.b16 %v295
    %v494 = vunpack.c.l.b16 %v296
    %v495 = vunpack.c.h.b16 %v296
    %v496 = vunpack.c.l.b16 %v297
    %v497 = vunpack.c.h.b16 %v297
    %v498 = vunpack.c.l.b16 %v298
    %v499 = vunpack.c.h.b16 %v298
    %v500 = vunpack.c.l.b16 %v299
    %v501 = vunpack.c.h.b16 %v299
    %v502 = vunpack.c.l.b16 %v300
    %v503 = vunpack.c.h.b16 %v300
    %v504 = vunpack.c.l.b16 %v301
    %v505 = vunpack.c.h.b16 %v301
    %v506 = vunpack.c.l.b16 %v302
    %v507 = vunpack.c.h.b16 %v302
    %v508 = vunpack.c.l.b16 %v303
    %v509 = vunpack.c.h.b16 %v303
    %v510 = vunpack.c.l.b16 %v304
    %v511 = vunpack.c.h.b16 %v304
    %v512 = vunpack.c.l.b16 %v305
    %v513 = vunpack.c.h.b16 %v305
    %v514 = vunpack.c.l.b16 %v306
    %v515 = vunpack.c.h.b16 %v306
    %v516 = vunpack.c.l.b16 %v307
    %v517 = vunpack.c.h.b16 %v307
    %v518 = vunpack.c.l.b16 %v308
    %v519 = vunpack.c.h.b16 %v308
    %v520 = vunpack.c.l.b16 %v309
    %v521 = vunpack.c.h.b16 %v309
    %v522 = vunpack.c.l.b16 %v310
    %v523 = vunpack.c.h.b16 %v310
    %v524 = vunpack.c.l.b16 %v311
    %v525 = vunpack.c.h.b16 %v311
    %v526 = vpack.c.b16 %v402, %v398
    %v527 = vpack.c.b16 %v403, %v399
    %v528 = vpack.c.b16 %v404, %v400
    %v529 = vpack.c.b16 %v405, %v401
    %v530 = vpack.c.b16 %v410, %v406
    %v531 = vpack.c.b16 %v411, %v407
    %v532 = vpack.c.b16 %v412, %v408
    %v533 = vpack.c.b16 %v413, %v409
    %v534 = vpack.c.b16 %v418, %v414
    %v535 = vpack.c.b16 %v419, %v415
    %v536 = vpack.c.b16 %v420, %v416
    %v537 = vpack.c.b16 %v421, %v417
    %v538 = vpack.c.b16 %v426, %v422
    %v539 = vpack.c.b16 %v427, %v423
    %v540 = vpack.c.b16 %v428, %v424
    %v541 = vpack.c.b16 %v429, %v425
    %v542 = vpack.c.b16 %v434, %v430
    %v543 = vpack.c.b16 %v435, %v431
    %v544 = vpack.c.b16 %v436, %v432
    %v545 = vpack.c.b16 %v437, %v433
    %v546 = vpack.c.b16 %v442, %v438
    %v547 = vpack.c.b16 %v443, %v439
    %v548 = vpack.c.b16 %v444, %v440
    %v549 = vpack.c.b16 %v445, %v441
    %v550 = vpack.c.b16 %v450, %v446
    %v551 = vpack.c.b16 %v451, %v447
    %v552 = vpack.c.b16 %v452, %v448
    %v553 = vpack.c.b16 %v453, %v449
    %v554 = vpack.c.b16 %v458, %v454
    %v555 = vpack.c.b16 %v459, %v455
    %v556 = vpack.c.b16 %v460, %v456
    %v557 = vpack.c.b16 %v461, %v457
    %v558 = vpack.c.b16 %v466, %v462
    %v559 = vpack.c.b16 %v467, %v463
    %v560 = vpack.c.b16 %v468, %v464
    %v561 = vpack.c.b16 %v469, %v465
    %v562 = vpack.c.b16 %v474, %v470
    %v563 = vpack.c.b16 %v475, %v471
    %v564 = vpack.c.b16 %v476, %v472
    %v565 = vpack.c.b16 %v477, %v473
    %v566 = vpack.c.b16 %v482, %v478
    %v567 = vpack.c.b16 %v483, %v479
    %v568 = vpack.c.b16 %v484, %v480
    %v569 = vpack.c.b16 %v485, %v481
    %v570 = vpack.c.b16 %v490, %v486
    %v571 = vpack.c.b16 %v491, %v487
    %v572 = vpack.c.b16 %v492, %v488
    %v573 = vpack.c.b16 %v493, %v489
    %v574 = vpack.c.b16 %v498, %v494
    %v575 = vpack.c.b16 %v499, %v495
    %v576 = vpack.c.b16 %v500, %v496
    %v577 = vpack.c.b16 %v501, %v497
    %v578 = vpack.c.b16 %v506, %v502
    %v579 = vpack.c.b16 %v507, %v503
    %v580 = vpack.c.b16 %v508, %v504
    %v581 = vpack.c.b16 %v509, %v505
    %v582 = vpack.c.b16 %v514, %v510
    %v583 = vpack.c.b16 %v515, %v511
    %v584 = vpack.c.b16 %v516, %v512
    %v585 = vpack.c.b16 %v517, %v513
    %v586 = vpack.c.b16 %v522, %v518
    %v587 = vpack.c.b16 %v523, %v519
    %v588 = vpack.c.b16 %v524, %v520
    %v589 = vpack.c.b16 %v525, %v521
    %654 = vmatprep.subr.bf16.mxu0 %v527
    %655 = vmatpush1.bf16.msra.mxu0 %v526
    %656 = vmatprep.subr.bf16.mxu0 %v531
    %657 = vmatpush1.bf16.msra.mxu0 %v530
    %658 = vmatprep.subr.bf16.mxu0 %v535
    %659 = vmatpush1.bf16.msra.mxu0 %v534
    %660 = vmatprep.subr.bf16.mxu0 %v539
    %661 = vmatpush1.bf16.msra.mxu0 %v538
    %662 = vmatprep.subr.bf16.mxu0 %v543
    %663 = vmatpush1.bf16.msra.mxu0 %v542
    %664 = vmatprep.subr.bf16.mxu0 %v547
    %665 = vmatpush1.bf16.msra.mxu0 %v546
    %666 = vmatprep.subr.bf16.mxu0 %v551
    %667 = vmatpush1.bf16.msra.mxu0 %v550
    %668 = vmatprep.subr.bf16.mxu0 %v555
    %669 = vmatpush1.bf16.msra.mxu0 %v554
    %670 = vmatprep.subr.bf16.mxu0 %v559
    %671 = vmatpush1.bf16.msra.mxu0 %v558
    %672 = vmatprep.subr.bf16.mxu0 %v563
    %673 = vmatpush1.bf16.msra.mxu0 %v562
    %674 = vmatprep.subr.bf16.mxu0 %v567
    %675 = vmatpush1.bf16.msra.mxu0 %v566
    %676 = vmatprep.subr.bf16.mxu0 %v571
    %677 = vmatpush1.bf16.msra.mxu0 %v570
    %678 = vmatprep.subr.bf16.mxu0 %v575
    %679 = vmatpush1.bf16.msra.mxu0 %v574
    %680 = vmatprep.subr.bf16.mxu0 %v579
    %681 = vmatpush1.bf16.msra.mxu0 %v578
    %682 = vmatprep.subr.bf16.mxu0 %v583
    %683 = vmatpush1.bf16.msra.mxu0 %v582
    %684 = vmatprep.subr.bf16.mxu0 %v587
    %685 = vmatpush1.bf16.msra.mxu0 %v586
    %686 = vmatprep.mubr.bf16.mxu0 %v247
    %687 = vmatmul.mubr.bf16.gmra.mrb[0].mxu0 %v246
    %v688 = vpop.f32.mrb[0].mxu0
    %v689 = vadd.f32 %v317, %v688
    %v690 = vpop.f32.mrb[0].mxu0
    %v691 = vadd.f32 %v321, %v690
    %v692 = vpop.f32.mrb[0].mxu0
    %v693 = vpop.f32.mrb[0].mxu0
    %694 = vdwg.mxu0
    %695 = vmatprep.subr.bf16.mxu0 %v529
    %696 = vmatpush1.bf16.msra.mxu0 %v528
    %697 = vmatprep.subr.bf16.mxu0 %v533
    %698 = vmatpush1.bf16.msra.mxu0 %v532
    %699 = vmatprep.subr.bf16.mxu0 %v537
    %700 = vmatpush1.bf16.msra.mxu0 %v536
    %701 = vmatprep.subr.bf16.mxu0 %v541
    %702 = vmatpush1.bf16.msra.mxu0 %v540
    %703 = vmatprep.subr.bf16.mxu0 %v545
    %704 = vmatpush1.bf16.msra.mxu0 %v544
    %705 = vmatprep.subr.bf16.mxu0 %v549
    %706 = vmatpush1.bf16.msra.mxu0 %v548
    %707 = vmatprep.subr.bf16.mxu0 %v553
    %708 = vmatpush1.bf16.msra.mxu0 %v552
    %709 = vmatprep.subr.bf16.mxu0 %v557
    %710 = vmatpush1.bf16.msra.mxu0 %v556
    %711 = vmatprep.subr.bf16.mxu0 %v561
    %712 = vmatpush1.bf16.msra.mxu0 %v560
    %713 = vmatprep.subr.bf16.mxu0 %v565
    %714 = vmatpush1.bf16.msra.mxu0 %v564
    %715 = vmatprep.subr.bf16.mxu0 %v569
    %716 = vmatpush1.bf16.msra.mxu0 %v568
    %717 = vmatprep.subr.bf16.mxu0 %v573
    %718 = vmatpush1.bf16.msra.mxu0 %v572
    %719 = vmatprep.subr.bf16.mxu0 %v577
    %720 = vmatpush1.bf16.msra.mxu0 %v576
    %721 = vmatprep.subr.bf16.mxu0 %v581
    %722 = vmatpush1.bf16.msra.mxu0 %v580
    %723 = vmatprep.subr.bf16.mxu0 %v585
    %724 = vmatpush1.bf16.msra.mxu0 %v584
    %725 = vmatprep.subr.bf16.mxu0 %v589
    %726 = vmatpush1.bf16.msra.mxu0 %v588
    %727 = vmatprep.mubr.bf16.mxu0 %v247
    %728 = vmatmul.mubr.bf16.gmra.mrb[0].mxu0 %v246
    %v729 = vpop.f32.mrb[0].mxu0
    %v730 = vadd.f32 %v325, %v729
    %v731 = vpop.f32.mrb[0].mxu0
    %v732 = vadd.f32 %v329, %v731
    %v733 = vpop.f32.mrb[0].mxu0
    %v734 = vpop.f32.mrb[0].mxu0
    %735 = vdwg.mxu0
    %v736 = vmax.f32 %v689, 0.0
    %v737 = vmax.f32 %v691, 0.0
    %v738 = vmax.f32 %v730, 0.0
    %v739 = vmax.f32 %v732, 0.0
    %v740 = vpack.c.bf16 %v736, %v736
    %v741 = vpack.c.bf16 %v737, %v737
    %v742 = vpack.c.bf16 %v738, %v738
    %v743 = vpack.c.bf16 %v739, %v739
    %v744 = vld [vmem:[#allocation5] sm:$0xff]
    %v745 = vld [vmem:[#allocation5 + $0x8] sm:$0xff]
    %v746 = vld [vmem:[#allocation5 + $0x10] sm:$0xff]
    %v747 = vld [vmem:[#allocation5 + $0x18] sm:$0xf]
    %v748 = vld [vmem:[#allocation5 + $0x1c] sm:$0xff]
    %v749 = vld [vmem:[#allocation5 + $0x24] sm:$0xff]
    %v750 = vld [vmem:[#allocation5 + $0x2c] sm:$0xff]
    %v751 = vld [vmem:[#allocation5 + $0x34] sm:$0xf]
    %v752 = vld [vmem:[#allocation5 + $0x38] sm:$0xff]
    %v753 = vld [vmem:[#allocation5 + $0x40] sm:$0xff]
    %v754 = vld [vmem:[#allocation5 + $0x48] sm:$0xff]
    %v755 = vld [vmem:[#allocation5 + $0x50] sm:$0xf]
    %v756 = vld [vmem:[#allocation5 + $0x54] sm:$0xff]
    %v757 = vld [vmem:[#allocation5 + $0x5c] sm:$0xff]
    %v758 = vld [vmem:[#allocation5 + $0x64] sm:$0xff]
    %v759 = vld [vmem:[#allocation5 + $0x6c] sm:$0xf]
    %v760 = vld [vmem:[#allocation5 + $0x70] sm:$0xff]
    %v761 = vld [vmem:[#allocation5 + $0x78] sm:$0xff]
    %v762 = vld [vmem:[#allocation5 + $0x80] sm:$0xff]
    %v763 = vld [vmem:[#allocation5 + $0x88] sm:$0xf]
    %v764 = vld [vmem:[#allocation5 + $0x8c] sm:$0xff]
    %v765 = vld [vmem:[#allocation5 + $0x94] sm:$0xff]
    %v766 = vld [vmem:[#allocation5 + $0x9c] sm:$0xff]
    %v767 = vld [vmem:[#allocation5 + $0xa4] sm:$0xf]
    %v768 = vld [vmem:[#allocation5 + $0xa8] sm:$0xff]
    %v769 = vld [vmem:[#allocation5 + $0xb0] sm:$0xff]
    %v770 = vld [vmem:[#allocation5 + $0xb8] sm:$0xff]
    %v771 = vld [vmem:[#allocation5 + $0xc0] sm:$0xf]
    %v772 = vld [vmem:[#allocation5 + $0xc4] sm:$0xff]
    %v773 = vld [vmem:[#allocation5 + $0xcc] sm:$0xff]
    %v774 = vld [vmem:[#allocation5 + $0xd4] sm:$0xff]
    %v775 = vld [vmem:[#allocation5 + $0xdc] sm:$0xf]
    %v776 = vld [vmem:[#allocation5 + $0xe0] sm:$0xff]
    %v777 = vld [vmem:[#allocation5 + $0xe8] sm:$0xff]
    %v778 = vld [vmem:[#allocation5 + $0xf0] sm:$0xff]
    %v779 = vld [vmem:[#allocation5 + $0xf8] sm:$0xf]
    %v780 = vld [vmem:[#allocation5 + $0xfc] sm:$0xff]
    %v781 = vld [vmem:[#allocation5 + $0x104] sm:$0xff]
    %v782 = vld [vmem:[#allocation5 + $0x10c] sm:$0xff]
    %v783 = vld [vmem:[#allocation5 + $0x114] sm:$0xf]
    %v784 = vld [vmem:[#allocation5 + $0x118] sm:$0xff]
    %v785 = vld [vmem:[#allocation5 + $0x120] sm:$0xff]
    %v786 = vld [vmem:[#allocation5 + $0x128] sm:$0xff]
    %v787 = vld [vmem:[#allocation5 + $0x130] sm:$0xf]
    %v788 = vld [vmem:[#allocation5 + $0x134] sm:$0xff]
    %v789 = vld [vmem:[#allocation5 + $0x13c] sm:$0xff]
    %v790 = vld [vmem:[#allocation5 + $0x144] sm:$0xff]
    %v791 = vld [vmem:[#allocation5 + $0x14c] sm:$0xf]
    %v792 = vld [vmem:[#allocation5 + $0x150] sm:$0xff]
    %v793 = vld [vmem:[#allocation5 + $0x158] sm:$0xff]
    %v794 = vld [vmem:[#allocation5 + $0x160] sm:$0xff]
    %v795 = vld [vmem:[#allocation5 + $0x168] sm:$0xf]
    %v796 = vld [vmem:[#allocation5 + $0x16c] sm:$0xff]
    %v797 = vld [vmem:[#allocation5 + $0x174] sm:$0xff]
    %v798 = vld [vmem:[#allocation5 + $0x17c] sm:$0xff]
    %v799 = vld [vmem:[#allocation5 + $0x184] sm:$0xf]
    %v800 = vld [vmem:[#allocation5 + $0x188] sm:$0xff]
    %v801 = vld [vmem:[#allocation5 + $0x190] sm:$0xff]
    %v802 = vld [vmem:[#allocation5 + $0x198] sm:$0xff]
    %v803 = vld [vmem:[#allocation5 + $0x1a0] sm:$0xf]
    %v804 = vld [vmem:[#allocation5 + $0x1a4] sm:$0xff]
    %v805 = vld [vmem:[#allocation5 + $0x1ac] sm:$0xff]
    %v806 = vld [vmem:[#allocation5 + $0x1b4] sm:$0xff]
    %v807 = vld [vmem:[#allocation5 + $0x1bc] sm:$0xf]
    %v808 = vld [vmem:[#allocation5 + $0x1c0] sm:$0xff]
    %v809 = vld [vmem:[#allocation5 + $0x1c8] sm:$0xff]
    %v810 = vld [vmem:[#allocation5 + $0x1d0] sm:$0xff]
    %v811 = vld [vmem:[#allocation5 + $0x1d8] sm:$0xf]
    %v812 = vld [vmem:[#allocation5 + $0x1dc] sm:$0xff]
    %v813 = vld [vmem:[#allocation5 + $0x1e4] sm:$0xff]
    %v814 = vld [vmem:[#allocation5 + $0x1ec] sm:$0xff]
    %v815 = vld [vmem:[#allocation5 + $0x1f4] sm:$0xf]
    %v816 = vld [vmem:[#allocation5 + $0x1f8] sm:$0xff]
    %v817 = vld [vmem:[#allocation5 + $0x200] sm:$0xff]
    %v818 = vld [vmem:[#allocation5 + $0x208] sm:$0xff]
    %v819 = vld [vmem:[#allocation5 + $0x210] sm:$0xf]
    %v820 = vld [vmem:[#allocation5 + $0x214] sm:$0xff]
    %v821 = vld [vmem:[#allocation5 + $0x21c] sm:$0xff]
    %v822 = vld [vmem:[#allocation5 + $0x224] sm:$0xff]
    %v823 = vld [vmem:[#allocation5 + $0x22c] sm:$0xf]
    %v824 = vld [vmem:[#allocation5 + $0x230] sm:$0xff]
    %v825 = vld [vmem:[#allocation5 + $0x238] sm:$0xff]
    %v826 = vld [vmem:[#allocation5 + $0x240] sm:$0xff]
    %v827 = vld [vmem:[#allocation5 + $0x248] sm:$0xf]
    %v828 = vld [vmem:[#allocation5 + $0x24c] sm:$0xff]
    %v829 = vld [vmem:[#allocation5 + $0x254] sm:$0xff]
    %v830 = vld [vmem:[#allocation5 + $0x25c] sm:$0xff]
    %v831 = vld [vmem:[#allocation5 + $0x264] sm:$0xf]
    %v832 = vld [vmem:[#allocation5 + $0x268] sm:$0xff]
    %v833 = vld [vmem:[#allocation5 + $0x270] sm:$0xff]
    %v834 = vld [vmem:[#allocation5 + $0x278] sm:$0xff]
    %v835 = vld [vmem:[#allocation5 + $0x280] sm:$0xf]
    %v836 = vld [vmem:[#allocation5 + $0x284] sm:$0xff]
    %v837 = vld [vmem:[#allocation5 + $0x28c] sm:$0xff]
    %v838 = vld [vmem:[#allocation5 + $0x294] sm:$0xff]
    %v839 = vld [vmem:[#allocation5 + $0x29c] sm:$0xf]
    %v840 = vld [vmem:[#allocation5 + $0x2a0] sm:$0xff]
    %v841 = vld [vmem:[#allocation5 + $0x2a8] sm:$0xff]
    %v842 = vld [vmem:[#allocation5 + $0x2b0] sm:$0xff]
    %v843 = vld [vmem:[#allocation5 + $0x2b8] sm:$0xf]
    %v844 = vld [vmem:[#allocation5 + $0x2bc] sm:$0xff]
    %v845 = vld [vmem:[#allocation5 + $0x2c4] sm:$0xff]
    %v846 = vld [vmem:[#allocation5 + $0x2cc] sm:$0xff]
    %v847 = vld [vmem:[#allocation5 + $0x2d4] sm:$0xf]
    %v848 = vld [vmem:[#allocation5 + $0x2d8] sm:$0xff]
    %v849 = vld [vmem:[#allocation5 + $0x2e0] sm:$0xff]
    %v850 = vld [vmem:[#allocation5 + $0x2e8] sm:$0xff]
    %v851 = vld [vmem:[#allocation5 + $0x2f0] sm:$0xf]
    %v852 = vld [vmem:[#allocation5 + $0x2f4] sm:$0xff]
    %v853 = vld [vmem:[#allocation5 + $0x2fc] sm:$0xff]
    %v854 = vld [vmem:[#allocation5 + $0x304] sm:$0xff]
    %v855 = vld [vmem:[#allocation5 + $0x30c] sm:$0xf]
    %v856 = vld [vmem:[#allocation5 + $0x310] sm:$0xff]
    %v857 = vld [vmem:[#allocation5 + $0x318] sm:$0xff]
    %v858 = vld [vmem:[#allocation5 + $0x320] sm:$0xff]
    %v859 = vld [vmem:[#allocation5 + $0x328] sm:$0xf]
    %v860 = vld [vmem:[#allocation5 + $0x32c] sm:$0xff]
    %v861 = vld [vmem:[#allocation5 + $0x334] sm:$0xff]
    %v862 = vld [vmem:[#allocation5 + $0x33c] sm:$0xff]
    %v863 = vld [vmem:[#allocation5 + $0x344] sm:$0xf]
    %v864 = vld [vmem:[#allocation5 + $0x348] sm:$0xff]
    %v865 = vld [vmem:[#allocation5 + $0x350] sm:$0xff]
    %v866 = vld [vmem:[#allocation5 + $0x358] sm:$0xff]
    %v867 = vld [vmem:[#allocation5 + $0x360] sm:$0xf]
    %v868 = vld [vmem:[#allocation5 + $0x364] sm:$0xff]
    %v869 = vld [vmem:[#allocation5 + $0x36c] sm:$0xff]
    %v870 = vld [vmem:[#allocation5 + $0x374] sm:$0xff]
    %v871 = vld [vmem:[#allocation5 + $0x37c] sm:$0xf]
    %v872 = vld [vmem:[#allocation5 + $0x380] sm:$0xff]
    %v873 = vld [vmem:[#allocation5 + $0x388] sm:$0xff]
    %v874 = vld [vmem:[#allocation5 + $0x390] sm:$0xff]
    %v875 = vld [vmem:[#allocation5 + $0x398] sm:$0xf]
    %v876 = vld [vmem:[#allocation5 + $0x39c] sm:$0xff]
    %v877 = vld [vmem:[#allocation5 + $0x3a4] sm:$0xff]
    %v878 = vld [vmem:[#allocation5 + $0x3ac] sm:$0xff]
    %v879 = vld [vmem:[#allocation5 + $0x3b4] sm:$0xf]
    %v880 = vld [vmem:[#allocation5 + $0x3b8] sm:$0xff]
    %v881 = vld [vmem:[#allocation5 + $0x3c0] sm:$0xff]
    %v882 = vld [vmem:[#allocation5 + $0x3c8] sm:$0xff]
    %v883 = vld [vmem:[#allocation5 + $0x3d0] sm:$0xf]
    %v884 = vld [vmem:[#allocation5 + $0x3d4] sm:$0xff]
    %v885 = vld [vmem:[#allocation5 + $0x3dc] sm:$0xff]
    %v886 = vld [vmem:[#allocation5 + $0x3e4] sm:$0xff]
    %v887 = vld [vmem:[#allocation5 + $0x3ec] sm:$0xf]
    %v888 = vld [vmem:[#allocation5 + $0x3f0] sm:$0xff]
    %v889 = vld [vmem:[#allocation5 + $0x3f8] sm:$0xff]
    %v890 = vld [vmem:[#allocation5 + $0x400] sm:$0xff]
    %v891 = vld [vmem:[#allocation5 + $0x408] sm:$0xf]
    %v892 = vld [vmem:[#allocation5 + $0x40c] sm:$0xff]
    %v893 = vld [vmem:[#allocation5 + $0x414] sm:$0xff]
    %v894 = vld [vmem:[#allocation5 + $0x41c] sm:$0xff]
    %v895 = vld [vmem:[#allocation5 + $0x424] sm:$0xf]
    %v896 = vld [vmem:[#allocation5 + $0x428] sm:$0xff]
    %v897 = vld [vmem:[#allocation5 + $0x430] sm:$0xff]
    %v898 = vld [vmem:[#allocation5 + $0x438] sm:$0xff]
    %v899 = vld [vmem:[#allocation5 + $0x440] sm:$0xf]
    %v900 = vld [vmem:[#allocation5 + $0x444] sm:$0xff]
    %v901 = vld [vmem:[#allocation5 + $0x44c] sm:$0xff]
    %v902 = vld [vmem:[#allocation5 + $0x454] sm:$0xff]
    %v903 = vld [vmem:[#allocation5 + $0x45c] sm:$0xf]
    %v904 = vld [vmem:[#allocation5 + $0x460] sm:$0xff]
    %v905 = vld [vmem:[#allocation5 + $0x468] sm:$0xff]
    %v906 = vld [vmem:[#allocation5 + $0x470] sm:$0xff]
    %v907 = vld [vmem:[#allocation5 + $0x478] sm:$0xf]
    %v908 = vld [vmem:[#allocation5 + $0x47c] sm:$0xff]
    %v909 = vld [vmem:[#allocation5 + $0x484] sm:$0xff]
    %v910 = vld [vmem:[#allocation5 + $0x48c] sm:$0xff]
    %v911 = vld [vmem:[#allocation5 + $0x494] sm:$0xf]
    %v912 = vld [vmem:[#allocation5 + $0x498] sm:$0xff]
    %v913 = vld [vmem:[#allocation5 + $0x4a0] sm:$0xff]
    %v914 = vld [vmem:[#allocation5 + $0x4a8] sm:$0xff]
    %v915 = vld [vmem:[#allocation5 + $0x4b0] sm:$0xf]
    %v916 = vld [vmem:[#allocation5 + $0x4b4] sm:$0xff]
    %v917 = vld [vmem:[#allocation5 + $0x4bc] sm:$0xff]
    %v918 = vld [vmem:[#allocation5 + $0x4c4] sm:$0xff]
    %v919 = vld [vmem:[#allocation5 + $0x4cc] sm:$0xf]
    %v920 = vld [vmem:[#allocation5 + $0x4d0] sm:$0xff]
    %v921 = vld [vmem:[#allocation5 + $0x4d8] sm:$0xff]
    %v922 = vld [vmem:[#allocation5 + $0x4e0] sm:$0xff]
    %v923 = vld [vmem:[#allocation5 + $0x4e8] sm:$0xf]
    %v924 = vld [vmem:[#allocation5 + $0x4ec] sm:$0xff]
    %v925 = vld [vmem:[#allocation5 + $0x4f4] sm:$0xff]
    %v926 = vld [vmem:[#allocation5 + $0x4fc] sm:$0xff]
    %v927 = vld [vmem:[#allocation5 + $0x504] sm:$0xf]
    %v928 = vld [vmem:[#allocation5 + $0x508] sm:$0xff]
    %v929 = vld [vmem:[#allocation5 + $0x510] sm:$0xff]
    %v930 = vld [vmem:[#allocation5 + $0x518] sm:$0xff]
    %v931 = vld [vmem:[#allocation5 + $0x520] sm:$0xf]
    %v932 = vld [vmem:[#allocation5 + $0x524] sm:$0xff]
    %v933 = vld [vmem:[#allocation5 + $0x52c] sm:$0xff]
    %v934 = vld [vmem:[#allocation5 + $0x534] sm:$0xff]
    %v935 = vld [vmem:[#allocation5 + $0x53c] sm:$0xf]
    %v936 = vld [vmem:[#allocation5 + $0x540] sm:$0xff]
    %v937 = vld [vmem:[#allocation5 + $0x548] sm:$0xff]
    %v938 = vld [vmem:[#allocation5 + $0x550] sm:$0xff]
    %v939 = vld [vmem:[#allocation5 + $0x558] sm:$0xf]
    %v940 = vld [vmem:[#allocation5 + $0x55c] sm:$0xff]
    %v941 = vld [vmem:[#allocation5 + $0x564] sm:$0xff]
    %v942 = vld [vmem:[#allocation5 + $0x56c] sm:$0xff]
    %v943 = vld [vmem:[#allocation5 + $0x574] sm:$0xf]
    %v944 = vld [vmem:[#allocation5 + $0x578] sm:$0xff]
    %v945 = vld [vmem:[#allocation5 + $0x580] sm:$0xff]
    %v946 = vld [vmem:[#allocation5 + $0x588] sm:$0xff]
    %v947 = vld [vmem:[#allocation5 + $0x590] sm:$0xf]
    %v948 = vld [vmem:[#allocation5 + $0x594] sm:$0xff]
    %v949 = vld [vmem:[#allocation5 + $0x59c] sm:$0xff]
    %v950 = vld [vmem:[#allocation5 + $0x5a4] sm:$0xff]
    %v951 = vld [vmem:[#allocation5 + $0x5ac] sm:$0xf]
    %v952 = vld [vmem:[#allocation5 + $0x5b0] sm:$0xff]
    %v953 = vld [vmem:[#allocation5 + $0x5b8] sm:$0xff]
    %v954 = vld [vmem:[#allocation5 + $0x5c0] sm:$0xff]
    %v955 = vld [vmem:[#allocation5 + $0x5c8] sm:$0xf]
    %v956 = vld [vmem:[#allocation5 + $0x5cc] sm:$0xff]
    %v957 = vld [vmem:[#allocation5 + $0x5d4] sm:$0xff]
    %v958 = vld [vmem:[#allocation5 + $0x5dc] sm:$0xff]
    %v959 = vld [vmem:[#allocation5 + $0x5e4] sm:$0xf]
    %v960 = vld [vmem:[#allocation5 + $0x5e8] sm:$0xff]
    %v961 = vld [vmem:[#allocation5 + $0x5f0] sm:$0xff]
    %v962 = vld [vmem:[#allocation5 + $0x5f8] sm:$0xff]
    %v963 = vld [vmem:[#allocation5 + $0x600] sm:$0xf]
    %v964 = vld [vmem:[#allocation5 + $0x604] sm:$0xff]
    %v965 = vld [vmem:[#allocation5 + $0x60c] sm:$0xff]
    %v966 = vld [vmem:[#allocation5 + $0x614] sm:$0xff]
    %v967 = vld [vmem:[#allocation5 + $0x61c] sm:$0xf]
    %v968 = vld [vmem:[#allocation5 + $0x620] sm:$0xff]
    %v969 = vld [vmem:[#allocation5 + $0x628] sm:$0xff]
    %v970 = vld [vmem:[#allocation5 + $0x630] sm:$0xff]
    %v971 = vld [vmem:[#allocation5 + $0x638] sm:$0xf]
    %v972 = vld [vmem:[#allocation5 + $0x63c] sm:$0xff]
    %v973 = vld [vmem:[#allocation5 + $0x644] sm:$0xff]
    %v974 = vld [vmem:[#allocation5 + $0x64c] sm:$0xff]
    %v975 = vld [vmem:[#allocation5 + $0x654] sm:$0xf]
    %v976 = vld [vmem:[#allocation5 + $0x658] sm:$0xff]
    %v977 = vld [vmem:[#allocation5 + $0x660] sm:$0xff]
    %v978 = vld [vmem:[#allocation5 + $0x668] sm:$0xff]
    %v979 = vld [vmem:[#allocation5 + $0x670] sm:$0xf]
    %v980 = vld [vmem:[#allocation5 + $0x674] sm:$0xff]
    %v981 = vld [vmem:[#allocation5 + $0x67c] sm:$0xff]
    %v982 = vld [vmem:[#allocation5 + $0x684] sm:$0xff]
    %v983 = vld [vmem:[#allocation5 + $0x68c] sm:$0xf]
    %v984 = vld [vmem:[#allocation5 + $0x690] sm:$0xff]
    %v985 = vld [vmem:[#allocation5 + $0x698] sm:$0xff]
    %v986 = vld [vmem:[#allocation5 + $0x6a0] sm:$0xff]
    %v987 = vld [vmem:[#allocation5 + $0x6a8] sm:$0xf]
    %v988 = vld [vmem:[#allocation5 + $0x6ac] sm:$0xff]
    %v989 = vld [vmem:[#allocation5 + $0x6b4] sm:$0xff]
    %v990 = vld [vmem:[#allocation5 + $0x6bc] sm:$0xff]
    %v991 = vld [vmem:[#allocation5 + $0x6c4] sm:$0xf]
    %v992 = vld [vmem:[#allocation5 + $0x6c8] sm:$0xff]
    %v993 = vld [vmem:[#allocation5 + $0x6d0] sm:$0xff]
    %v994 = vld [vmem:[#allocation5 + $0x6d8] sm:$0xff]
    %v995 = vld [vmem:[#allocation5 + $0x6e0] sm:$0xf]
    %v996 = vld [vmem:[#allocation5 + $0x6e4] sm:$0xff]
    %v997 = vld [vmem:[#allocation5 + $0x6ec] sm:$0xff]
    %v998 = vld [vmem:[#allocation5 + $0x6f4] sm:$0xff]
    %v999 = vld [vmem:[#allocation5 + $0x6fc] sm:$0xf]
    %v1000 = vld [vmem:[%s8] sm:$0xff]
    %v1002 = vlaneseq
    %v1003 = vshrl.u32 %v1002, 7
    %v1004 = vsub.s32 0, %v1003
    %v1005 = vrot.slane %v1000, %v1004
    %v1006 = vlaneseq
    %v1007 = vshrl.u32 %v1006, 7
    %v1008 = vsub.s32 1, %v1007
    %v1009 = vrot.slane %v1000, %v1008
    %v1010 = vlaneseq
    %v1011 = vshrl.u32 %v1010, 7
    %v1012 = vsub.s32 2, %v1011
    %v1013 = vrot.slane %v1000, %v1012
    %v1014 = vlaneseq
    %v1015 = vshrl.u32 %v1014, 7
    %v1016 = vsub.s32 3, %v1015
    %v1017 = vrot.slane %v1000, %v1016
    %v1018 = vlaneseq
    %v1019 = vshrl.u32 %v1018, 7
    %v1020 = vsub.s32 4, %v1019
    %v1021 = vrot.slane %v1000, %v1020
    %v1022 = vlaneseq
    %v1023 = vshrl.u32 %v1022, 7
    %v1024 = vsub.s32 5, %v1023
    %v1025 = vrot.slane %v1000, %v1024
    %v1026 = vlaneseq
    %v1027 = vshrl.u32 %v1026, 7
    %v1028 = vsub.s32 6, %v1027
    %v1029 = vrot.slane %v1000, %v1028
    %v1293 = vunpack.c.l.b16 %v744
    %v1294 = vunpack.c.h.b16 %v744
    %v1295 = vunpack.c.l.b16 %v745
    %v1296 = vunpack.c.h.b16 %v745
    %v1297 = vunpack.c.l.b16 %v746
    %v1298 = vunpack.c.h.b16 %v746
    %v1299 = vunpack.c.l.b16 %v747
    %v1300 = vunpack.c.l.b16 %v748
    %v1301 = vunpack.c.h.b16 %v748
    %v1302 = vunpack.c.l.b16 %v749
    %v1303 = vunpack.c.h.b16 %v749
    %v1304 = vunpack.c.l.b16 %v750
    %v1305 = vunpack.c.h.b16 %v750
    %v1306 = vunpack.c.l.b16 %v751
    %v1307 = vunpack.c.l.b16 %v752
    %v1308 = vunpack.c.h.b16 %v752
    %v1309 = vunpack.c.l.b16 %v753
    %v1310 = vunpack.c.h.b16 %v753
    %v1311 = vunpack.c.l.b16 %v754
    %v1312 = vunpack.c.h.b16 %v754
    %v1313 = vunpack.c.l.b16 %v755
    %v1314 = vunpack.c.l.b16 %v756
    %v1315 = vunpack.c.h.b16 %v756
    %v1316 = vunpack.c.l.b16 %v757
    %v1317 = vunpack.c.h.b16 %v757
    %v1318 = vunpack.c.l.b16 %v758
    %v1319 = vunpack.c.h.b16 %v758
    %v1320 = vunpack.c.l.b16 %v759
    %v1321 = vunpack.c.l.b16 %v760
    %v1322 = vunpack.c.h.b16 %v760
    %v1323 = vunpack.c.l.b16 %v761
    %v1324 = vunpack.c.h.b16 %v761
    %v1325 = vunpack.c.l.b16 %v762
    %v1326 = vunpack.c.h.b16 %v762
    %v1327 = vunpack.c.l.b16 %v763
    %v1328 = vunpack.c.l.b16 %v764
    %v1329 = vunpack.c.h.b16 %v764
    %v1330 = vunpack.c.l.b16 %v765
    %v1331 = vunpack.c.h.b16 %v765
    %v1332 = vunpack.c.l.b16 %v766
    %v1333 = vunpack.c.h.b16 %v766
    %v1334 = vunpack.c.l.b16 %v767
    %v1335 = vunpack.c.l.b16 %v768
    %v1336 = vunpack.c.h.b16 %v768
    %v1337 = vunpack.c.l.b16 %v769
    %v1338 = vunpack.c.h.b16 %v769
    %v1339 = vunpack.c.l.b16 %v770
    %v1340 = vunpack.c.h.b16 %v770
    %v1341 = vunpack.c.l.b16 %v771
    %v1342 = vunpack.c.l.b16 %v772
    %v1343 = vunpack.c.h.b16 %v772
    %v1344 = vunpack.c.l.b16 %v773
    %v1345 = vunpack.c.h.b16 %v773
    %v1346 = vunpack.c.l.b16 %v774
    %v1347 = vunpack.c.h.b16 %v774
    %v1348 = vunpack.c.l.b16 %v775
    %v1349 = vunpack.c.l.b16 %v776
    %v1350 = vunpack.c.h.b16 %v776
    %v1351 = vunpack.c.l.b16 %v777
    %v1352 = vunpack.c.h.b16 %v777
    %v1353 = vunpack.c.l.b16 %v778
    %v1354 = vunpack.c.h.b16 %v778
    %v1355 = vunpack.c.l.b16 %v779
    %v1356 = vunpack.c.l.b16 %v780
    %v1357 = vunpack.c.h.b16 %v780
    %v1358 = vunpack.c.l.b16 %v781
    %v1359 = vunpack.c.h.b16 %v781
    %v1360 = vunpack.c.l.b16 %v782
    %v1361 = vunpack.c.h.b16 %v782
    %v1362 = vunpack.c.l.b16 %v783
    %v1363 = vunpack.c.l.b16 %v784
    %v1364 = vunpack.c.h.b16 %v784
    %v1365 = vunpack.c.l.b16 %v785
    %v1366 = vunpack.c.h.b16 %v785
    %v1367 = vunpack.c.l.b16 %v786
    %v1368 = vunpack.c.h.b16 %v786
    %v1369 = vunpack.c.l.b16 %v787
    %v1370 = vunpack.c.l.b16 %v788
    %v1371 = vunpack.c.h.b16 %v788
    %v1372 = vunpack.c.l.b16 %v789
    %v1373 = vunpack.c.h.b16 %v789
    %v1374 = vunpack.c.l.b16 %v790
    %v1375 = vunpack.c.h.b16 %v790
    %v1376 = vunpack.c.l.b16 %v791
    %v1377 = vunpack.c.l.b16 %v792
    %v1378 = vunpack.c.h.b16 %v792
    %v1379 = vunpack.c.l.b16 %v793
    %v1380 = vunpack.c.h.b16 %v793
    %v1381 = vunpack.c.l.b16 %v794
    %v1382 = vunpack.c.h.b16 %v794
    %v1383 = vunpack.c.l.b16 %v795
    %v1384 = vunpack.c.l.b16 %v796
    %v1385 = vunpack.c.h.b16 %v796
    %v1386 = vunpack.c.l.b16 %v797
    %v1387 = vunpack.c.h.b16 %v797
    %v1388 = vunpack.c.l.b16 %v798
    %v1389 = vunpack.c.h.b16 %v798
    %v1390 = vunpack.c.l.b16 %v799
    %v1391 = vunpack.c.l.b16 %v800
    %v1392 = vunpack.c.h.b16 %v800
    %v1393 = vunpack.c.l.b16 %v801
    %v1394 = vunpack.c.h.b16 %v801
    %v1395 = vunpack.c.l.b16 %v802
    %v1396 = vunpack.c.h.b16 %v802
    %v1397 = vunpack.c.l.b16 %v803
    %v1398 = vunpack.c.l.b16 %v804
    %v1399 = vunpack.c.h.b16 %v804
    %v1400 = vunpack.c.l.b16 %v805
    %v1401 = vunpack.c.h.b16 %v805
    %v1402 = vunpack.c.l.b16 %v806
    %v1403 = vunpack.c.h.b16 %v806
    %v1404 = vunpack.c.l.b16 %v807
    %v1405 = vunpack.c.l.b16 %v808
    %v1406 = vunpack.c.h.b16 %v808
    %v1407 = vunpack.c.l.b16 %v809
    %v1408 = vunpack.c.h.b16 %v809
    %v1409 = vunpack.c.l.b16 %v810
    %v1410 = vunpack.c.h.b16 %v810
    %v1411 = vunpack.c.l.b16 %v811
    %v1412 = vunpack.c.l.b16 %v812
    %v1413 = vunpack.c.h.b16 %v812
    %v1414 = vunpack.c.l.b16 %v813
    %v1415 = vunpack.c.h.b16 %v813
    %v1416 = vunpack.c.l.b16 %v814
    %v1417 = vunpack.c.h.b16 %v814
    %v1418 = vunpack.c.l.b16 %v815
    %v1419 = vunpack.c.l.b16 %v816
    %v1420 = vunpack.c.h.b16 %v816
    %v1421 = vunpack.c.l.b16 %v817
    %v1422 = vunpack.c.h.b16 %v817
    %v1423 = vunpack.c.l.b16 %v818
    %v1424 = vunpack.c.h.b16 %v818
    %v1425 = vunpack.c.l.b16 %v819
    %v1426 = vunpack.c.l.b16 %v820
    %v1427 = vunpack.c.h.b16 %v820
    %v1428 = vunpack.c.l.b16 %v821
    %v1429 = vunpack.c.h.b16 %v821
    %v1430 = vunpack.c.l.b16 %v822
    %v1431 = vunpack.c.h.b16 %v822
    %v1432 = vunpack.c.l.b16 %v823
    %v1433 = vunpack.c.l.b16 %v824
    %v1434 = vunpack.c.h.b16 %v824
    %v1435 = vunpack.c.l.b16 %v825
    %v1436 = vunpack.c.h.b16 %v825
    %v1437 = vunpack.c.l.b16 %v826
    %v1438 = vunpack.c.h.b16 %v826
    %v1439 = vunpack.c.l.b16 %v827
    %v1440 = vunpack.c.l.b16 %v828
    %v1441 = vunpack.c.h.b16 %v828
    %v1442 = vunpack.c.l.b16 %v829
    %v1443 = vunpack.c.h.b16 %v829
    %v1444 = vunpack.c.l.b16 %v830
    %v1445 = vunpack.c.h.b16 %v830
    %v1446 = vunpack.c.l.b16 %v831
    %v1447 = vunpack.c.l.b16 %v832
    %v1448 = vunpack.c.h.b16 %v832
    %v1449 = vunpack.c.l.b16 %v833
    %v1450 = vunpack.c.h.b16 %v833
    %v1451 = vunpack.c.l.b16 %v834
    %v1452 = vunpack.c.h.b16 %v834
    %v1453 = vunpack.c.l.b16 %v835
    %v1454 = vunpack.c.l.b16 %v836
    %v1455 = vunpack.c.h.b16 %v836
    %v1456 = vunpack.c.l.b16 %v837
    %v1457 = vunpack.c.h.b16 %v837
    %v1458 = vunpack.c.l.b16 %v838
    %v1459 = vunpack.c.h.b16 %v838
    %v1460 = vunpack.c.l.b16 %v839
    %v1461 = vunpack.c.l.b16 %v840
    %v1462 = vunpack.c.h.b16 %v840
    %v1463 = vunpack.c.l.b16 %v841
    %v1464 = vunpack.c.h.b16 %v841
    %v1465 = vunpack.c.l.b16 %v842
    %v1466 = vunpack.c.h.b16 %v842
    %v1467 = vunpack.c.l.b16 %v843
    %v1468 = vunpack.c.l.b16 %v844
    %v1469 = vunpack.c.h.b16 %v844
    %v1470 = vunpack.c.l.b16 %v845
    %v1471 = vunpack.c.h.b16 %v845
    %v1472 = vunpack.c.l.b16 %v846
    %v1473 = vunpack.c.h.b16 %v846
    %v1474 = vunpack.c.l.b16 %v847
    %v1475 = vunpack.c.l.b16 %v848
    %v1476 = vunpack.c.h.b16 %v848
    %v1477 = vunpack.c.l.b16 %v849
    %v1478 = vunpack.c.h.b16 %v849
    %v1479 = vunpack.c.l.b16 %v850
    %v1480 = vunpack.c.h.b16 %v850
    %v1481 = vunpack.c.l.b16 %v851
    %v1482 = vunpack.c.l.b16 %v852
    %v1483 = vunpack.c.h.b16 %v852
    %v1484 = vunpack.c.l.b16 %v853
    %v1485 = vunpack.c.h.b16 %v853
    %v1486 = vunpack.c.l.b16 %v854
    %v1487 = vunpack.c.h.b16 %v854
    %v1488 = vunpack.c.l.b16 %v855
    %v1489 = vunpack.c.l.b16 %v856
    %v1490 = vunpack.c.h.b16 %v856
    %v1491 = vunpack.c.l.b16 %v857
    %v1492 = vunpack.c.h.b16 %v857
    %v1493 = vunpack.c.l.b16 %v858
    %v1494 = vunpack.c.h.b16 %v858
    %v1495 = vunpack.c.l.b16 %v859
    %v1496 = vunpack.c.l.b16 %v860
    %v1497 = vunpack.c.h.b16 %v860
    %v1498 = vunpack.c.l.b16 %v861
    %v1499 = vunpack.c.h.b16 %v861
    %v1500 = vunpack.c.l.b16 %v862
    %v1501 = vunpack.c.h.b16 %v862
    %v1502 = vunpack.c.l.b16 %v863
    %v1503 = vunpack.c.l.b16 %v864
    %v1504 = vunpack.c.h.b16 %v864
    %v1505 = vunpack.c.l.b16 %v865
    %v1506 = vunpack.c.h.b16 %v865
    %v1507 = vunpack.c.l.b16 %v866
    %v1508 = vunpack.c.h.b16 %v866
    %v1509 = vunpack.c.l.b16 %v867
    %v1510 = vunpack.c.l.b16 %v868
    %v1511 = vunpack.c.h.b16 %v868
    %v1512 = vunpack.c.l.b16 %v869
    %v1513 = vunpack.c.h.b16 %v869
    %v1514 = vunpack.c.l.b16 %v870
    %v1515 = vunpack.c.h.b16 %v870
    %v1516 = vunpack.c.l.b16 %v871
    %v1517 = vunpack.c.l.b16 %v872
    %v1518 = vunpack.c.h.b16 %v872
    %v1519 = vunpack.c.l.b16 %v873
    %v1520 = vunpack.c.h.b16 %v873
    %v1521 = vunpack.c.l.b16 %v874
    %v1522 = vunpack.c.h.b16 %v874
    %v1523 = vunpack.c.l.b16 %v875
    %v1524 = vunpack.c.l.b16 %v876
    %v1525 = vunpack.c.h.b16 %v876
    %v1526 = vunpack.c.l.b16 %v877
    %v1527 = vunpack.c.h.b16 %v877
    %v1528 = vunpack.c.l.b16 %v878
    %v1529 = vunpack.c.h.b16 %v878
    %v1530 = vunpack.c.l.b16 %v879
    %v1531 = vunpack.c.l.b16 %v880
    %v1532 = vunpack.c.h.b16 %v880
    %v1533 = vunpack.c.l.b16 %v881
    %v1534 = vunpack.c.h.b16 %v881
    %v1535 = vunpack.c.l.b16 %v882
    %v1536 = vunpack.c.h.b16 %v882
    %v1537 = vunpack.c.l.b16 %v883
    %v1538 = vunpack.c.l.b16 %v884
    %v1539 = vunpack.c.h.b16 %v884
    %v1540 = vunpack.c.l.b16 %v885
    %v1541 = vunpack.c.h.b16 %v885
    %v1542 = vunpack.c.l.b16 %v886
    %v1543 = vunpack.c.h.b16 %v886
    %v1544 = vunpack.c.l.b16 %v887
    %v1545 = vunpack.c.l.b16 %v888
    %v1546 = vunpack.c.h.b16 %v888
    %v1547 = vunpack.c.l.b16 %v889
    %v1548 = vunpack.c.h.b16 %v889
    %v1549 = vunpack.c.l.b16 %v890
    %v1550 = vunpack.c.h.b16 %v890
    %v1551 = vunpack.c.l.b16 %v891
    %v1552 = vunpack.c.l.b16 %v892
    %v1553 = vunpack.c.h.b16 %v892
    %v1554 = vunpack.c.l.b16 %v893
    %v1555 = vunpack.c.h.b16 %v893
    %v1556 = vunpack.c.l.b16 %v894
    %v1557 = vunpack.c.h.b16 %v894
    %v1558 = vunpack.c.l.b16 %v895
    %v1559 = vunpack.c.l.b16 %v896
    %v1560 = vunpack.c.h.b16 %v896
    %v1561 = vunpack.c.l.b16 %v897
    %v1562 = vunpack.c.h.b16 %v897
    %v1563 = vunpack.c.l.b16 %v898
    %v1564 = vunpack.c.h.b16 %v898
    %v1565 = vunpack.c.l.b16 %v899
    %v1566 = vunpack.c.l.b16 %v900
    %v1567 = vunpack.c.h.b16 %v900
    %v1568 = vunpack.c.l.b16 %v901
    %v1569 = vunpack.c.h.b16 %v901
    %v1570 = vunpack.c.l.b16 %v902
    %v1571 = vunpack.c.h.b16 %v902
    %v1572 = vunpack.c.l.b16 %v903
    %v1573 = vunpack.c.l.b16 %v904
    %v1574 = vunpack.c.h.b16 %v904
    %v1575 = vunpack.c.l.b16 %v905
    %v1576 = vunpack.c.h.b16 %v905
    %v1577 = vunpack.c.l.b16 %v906
    %v1578 = vunpack.c.h.b16 %v906
    %v1579 = vunpack.c.l.b16 %v907
    %v1580 = vunpack.c.l.b16 %v908
    %v1581 = vunpack.c.h.b16 %v908
    %v1582 = vunpack.c.l.b16 %v909
    %v1583 = vunpack.c.h.b16 %v909
    %v1584 = vunpack.c.l.b16 %v910
    %v1585 = vunpack.c.h.b16 %v910
    %v1586 = vunpack.c.l.b16 %v911
    %v1587 = vunpack.c.l.b16 %v912
    %v1588 = vunpack.c.h.b16 %v912
    %v1589 = vunpack.c.l.b16 %v913
    %v1590 = vunpack.c.h.b16 %v913
    %v1591 = vunpack.c.l.b16 %v914
    %v1592 = vunpack.c.h.b16 %v914
    %v1593 = vunpack.c.l.b16 %v915
    %v1594 = vunpack.c.l.b16 %v916
    %v1595 = vunpack.c.h.b16 %v916
    %v1596 = vunpack.c.l.b16 %v917
    %v1597 = vunpack.c.h.b16 %v917
    %v1598 = vunpack.c.l.b16 %v918
    %v1599 = vunpack.c.h.b16 %v918
    %v1600 = vunpack.c.l.b16 %v919
    %v1601 = vunpack.c.l.b16 %v920
    %v1602 = vunpack.c.h.b16 %v920
    %v1603 = vunpack.c.l.b16 %v921
    %v1604 = vunpack.c.h.b16 %v921
    %v1605 = vunpack.c.l.b16 %v922
    %v1606 = vunpack.c.h.b16 %v922
    %v1607 = vunpack.c.l.b16 %v923
    %v1608 = vunpack.c.l.b16 %v924
    %v1609 = vunpack.c.h.b16 %v924
    %v1610 = vunpack.c.l.b16 %v925
    %v1611 = vunpack.c.h.b16 %v925
    %v1612 = vunpack.c.l.b16 %v926
    %v1613 = vunpack.c.h.b16 %v926
    %v1614 = vunpack.c.l.b16 %v927
    %v1615 = vunpack.c.l.b16 %v928
    %v1616 = vunpack.c.h.b16 %v928
    %v1617 = vunpack.c.l.b16 %v929
    %v1618 = vunpack.c.h.b16 %v929
    %v1619 = vunpack.c.l.b16 %v930
    %v1620 = vunpack.c.h.b16 %v930
    %v1621 = vunpack.c.l.b16 %v931
    %v1622 = vunpack.c.l.b16 %v932
    %v1623 = vunpack.c.h.b16 %v932
    %v1624 = vunpack.c.l.b16 %v933
    %v1625 = vunpack.c.h.b16 %v933
    %v1626 = vunpack.c.l.b16 %v934
    %v1627 = vunpack.c.h.b16 %v934
    %v1628 = vunpack.c.l.b16 %v935
    %v1629 = vunpack.c.l.b16 %v936
    %v1630 = vunpack.c.h.b16 %v936
    %v1631 = vunpack.c.l.b16 %v937
    %v1632 = vunpack.c.h.b16 %v937
    %v1633 = vunpack.c.l.b16 %v938
    %v1634 = vunpack.c.h.b16 %v938
    %v1635 = vunpack.c.l.b16 %v939
    %v1636 = vunpack.c.l.b16 %v940
    %v1637 = vunpack.c.h.b16 %v940
    %v1638 = vunpack.c.l.b16 %v941
    %v1639 = vunpack.c.h.b16 %v941
    %v1640 = vunpack.c.l.b16 %v942
    %v1641 = vunpack.c.h.b16 %v942
    %v1642 = vunpack.c.l.b16 %v943
    %v1643 = vunpack.c.l.b16 %v944
    %v1644 = vunpack.c.h.b16 %v944
    %v1645 = vunpack.c.l.b16 %v945
    %v1646 = vunpack.c.h.b16 %v945
    %v1647 = vunpack.c.l.b16 %v946
    %v1648 = vunpack.c.h.b16 %v946
    %v1649 = vunpack.c.l.b16 %v947
    %v1650 = vunpack.c.l.b16 %v948
    %v1651 = vunpack.c.h.b16 %v948
    %v1652 = vunpack.c.l.b16 %v949
    %v1653 = vunpack.c.h.b16 %v949
    %v1654 = vunpack.c.l.b16 %v950
    %v1655 = vunpack.c.h.b16 %v950
    %v1656 = vunpack.c.l.b16 %v951
    %v1657 = vunpack.c.l.b16 %v952
    %v1658 = vunpack.c.h.b16 %v952
    %v1659 = vunpack.c.l.b16 %v953
    %v1660 = vunpack.c.h.b16 %v953
    %v1661 = vunpack.c.l.b16 %v954
    %v1662 = vunpack.c.h.b16 %v954
    %v1663 = vunpack.c.l.b16 %v955
    %v1664 = vunpack.c.l.b16 %v956
    %v1665 = vunpack.c.h.b16 %v956
    %v1666 = vunpack.c.l.b16 %v957
    %v1667 = vunpack.c.h.b16 %v957
    %v1668 = vunpack.c.l.b16 %v958
    %v1669 = vunpack.c.h.b16 %v958
    %v1670 = vunpack.c.l.b16 %v959
    %v1671 = vunpack.c.l.b16 %v960
    %v1672 = vunpack.c.h.b16 %v960
    %v1673 = vunpack.c.l.b16 %v961
    %v1674 = vunpack.c.h.b16 %v961
    %v1675 = vunpack.c.l.b16 %v962
    %v1676 = vunpack.c.h.b16 %v962
    %v1677 = vunpack.c.l.b16 %v963
    %v1678 = vunpack.c.l.b16 %v964
    %v1679 = vunpack.c.h.b16 %v964
    %v1680 = vunpack.c.l.b16 %v965
    %v1681 = vunpack.c.h.b16 %v965
    %v1682 = vunpack.c.l.b16 %v966
    %v1683 = vunpack.c.h.b16 %v966
    %v1684 = vunpack.c.l.b16 %v967
    %v1685 = vunpack.c.l.b16 %v968
    %v1686 = vunpack.c.h.b16 %v968
    %v1687 = vunpack.c.l.b16 %v969
    %v1688 = vunpack.c.h.b16 %v969
    %v1689 = vunpack.c.l.b16 %v970
    %v1690 = vunpack.c.h.b16 %v970
    %v1691 = vunpack.c.l.b16 %v971
    %v1692 = vunpack.c.l.b16 %v972
    %v1693 = vunpack.c.h.b16 %v972
    %v1694 = vunpack.c.l.b16 %v973
    %v1695 = vunpack.c.h.b16 %v973
    %v1696 = vunpack.c.l.b16 %v974
    %v1697 = vunpack.c.h.b16 %v974
    %v1698 = vunpack.c.l.b16 %v975
    %v1699 = vunpack.c.l.b16 %v976
    %v1700 = vunpack.c.h.b16 %v976
    %v1701 = vunpack.c.l.b16 %v977
    %v1702 = vunpack.c.h.b16 %v977
    %v1703 = vunpack.c.l.b16 %v978
    %v1704 = vunpack.c.h.b16 %v978
    %v1705 = vunpack.c.l.b16 %v979
    %v1706 = vunpack.c.l.b16 %v980
    %v1707 = vunpack.c.h.b16 %v980
    %v1708 = vunpack.c.l.b16 %v981
    %v1709 = vunpack.c.h.b16 %v981
    %v1710 = vunpack.c.l.b16 %v982
    %v1711 = vunpack.c.h.b16 %v982
    %v1712 = vunpack.c.l.b16 %v983
    %v1713 = vunpack.c.l.b16 %v984
    %v1714 = vunpack.c.h.b16 %v984
    %v1715 = vunpack.c.l.b16 %v985
    %v1716 = vunpack.c.h.b16 %v985
    %v1717 = vunpack.c.l.b16 %v986
    %v1718 = vunpack.c.h.b16 %v986
    %v1719 = vunpack.c.l.b16 %v987
    %v1720 = vunpack.c.l.b16 %v988
    %v1721 = vunpack.c.h.b16 %v988
    %v1722 = vunpack.c.l.b16 %v989
    %v1723 = vunpack.c.h.b16 %v989
    %v1724 = vunpack.c.l.b16 %v990
    %v1725 = vunpack.c.h.b16 %v990
    %v1726 = vunpack.c.l.b16 %v991
    %v1727 = vunpack.c.l.b16 %v992
    %v1728 = vunpack.c.h.b16 %v992
    %v1729 = vunpack.c.l.b16 %v993
    %v1730 = vunpack.c.h.b16 %v993
    %v1731 = vunpack.c.l.b16 %v994
    %v1732 = vunpack.c.h.b16 %v994
    %v1733 = vunpack.c.l.b16 %v995
    %v1734 = vunpack.c.l.b16 %v996
    %v1735 = vunpack.c.h.b16 %v996
    %v1736 = vunpack.c.l.b16 %v997
    %v1737 = vunpack.c.h.b16 %v997
    %v1738 = vunpack.c.l.b16 %v998
    %v1739 = vunpack.c.h.b16 %v998
    %v1740 = vunpack.c.l.b16 %v999
    %v1741 = vpack.c.b16 %v1300, %v1293
    %v1742 = vpack.c.b16 %v1301, %v1294
    %v1743 = vpack.c.b16 %v1302, %v1295
    %v1744 = vpack.c.b16 %v1303, %v1296
    %v1745 = vpack.c.b16 %v1304, %v1297
    %v1746 = vpack.c.b16 %v1305, %v1298
    %v1747 = vpack.c.b16 %v1306, %v1299
    %v1748 = vpack.c.b16 %v1314, %v1307
    %v1749 = vpack.c.b16 %v1315, %v1308
    %v1750 = vpack.c.b16 %v1316, %v1309
    %v1751 = vpack.c.b16 %v1317, %v1310
    %v1752 = vpack.c.b16 %v1318, %v1311
    %v1753 = vpack.c.b16 %v1319, %v1312
    %v1754 = vpack.c.b16 %v1320, %v1313
    %v1755 = vpack.c.b16 %v1328, %v1321
    %v1756 = vpack.c.b16 %v1329, %v1322
    %v1757 = vpack.c.b16 %v1330, %v1323
    %v1758 = vpack.c.b16 %v1331, %v1324
    %v1759 = vpack.c.b16 %v1332, %v1325
    %v1760 = vpack.c.b16 %v1333, %v1326
    %v1761 = vpack.c.b16 %v1334, %v1327
    %v1762 = vpack.c.b16 %v1342, %v1335
    %v1763 = vpack.c.b16 %v1343, %v1336
    %v1764 = vpack.c.b16 %v1344, %v1337
    %v1765 = vpack.c.b16 %v1345, %v1338
    %v1766 = vpack.c.b16 %v1346, %v1339
    %v1767 = vpack.c.b16 %v1347, %v1340
    %v1768 = vpack.c.b16 %v1348, %v1341
    %v1769 = vpack.c.b16 %v1356, %v1349
    %v1770 = vpack.c.b16 %v1357, %v1350
    %v1771 = vpack.c.b16 %v1358, %v1351
    %v1772 = vpack.c.b16 %v1359, %v1352
    %v1773 = vpack.c.b16 %v1360, %v1353
    %v1774 = vpack.c.b16 %v1361, %v1354
    %v1775 = vpack.c.b16 %v1362, %v1355
    %v1776 = vpack.c.b16 %v1370, %v1363
    %v1777 = vpack.c.b16 %v1371, %v1364
    %v1778 = vpack.c.b16 %v1372, %v1365
    %v1779 = vpack.c.b16 %v1373, %v1366
    %v1780 = vpack.c.b16 %v1374, %v1367
    %v1781 = vpack.c.b16 %v1375, %v1368
    %v1782 = vpack.c.b16 %v1376, %v1369
    %v1783 = vpack.c.b16 %v1384, %v1377
    %v1784 = vpack.c.b16 %v1385, %v1378
    %v1785 = vpack.c.b16 %v1386, %v1379
    %v1786 = vpack.c.b16 %v1387, %v1380
    %v1787 = vpack.c.b16 %v1388, %v1381
    %v1788 = vpack.c.b16 %v1389, %v1382
    %v1789 = vpack.c.b16 %v1390, %v1383
    %v1790 = vpack.c.b16 %v1398, %v1391
    %v1791 = vpack.c.b16 %v1399, %v1392
    %v1792 = vpack.c.b16 %v1400, %v1393
    %v1793 = vpack.c.b16 %v1401, %v1394
    %v1794 = vpack.c.b16 %v1402, %v1395
    %v1795 = vpack.c.b16 %v1403, %v1396
    %v1796 = vpack.c.b16 %v1404, %v1397
    %v1797 = vpack.c.b16 %v1412, %v1405
    %v1798 = vpack.c.b16 %v1413, %v1406
    %v1799 = vpack.c.b16 %v1414, %v1407
    %v1800 = vpack.c.b16 %v1415, %v1408
    %v1801 = vpack.c.b16 %v1416, %v1409
    %v1802 = vpack.c.b16 %v1417, %v1410
    %v1803 = vpack.c.b16 %v1418, %v1411
    %v1804 = vpack.c.b16 %v1426, %v1419
    %v1805 = vpack.c.b16 %v1427, %v1420
    %v1806 = vpack.c.b16 %v1428, %v1421
    %v1807 = vpack.c.b16 %v1429, %v1422
    %v1808 = vpack.c.b16 %v1430, %v1423
    %v1809 = vpack.c.b16 %v1431, %v1424
    %v1810 = vpack.c.b16 %v1432, %v1425
    %v1811 = vpack.c.b16 %v1440, %v1433
    %v1812 = vpack.c.b16 %v1441, %v1434
    %v1813 = vpack.c.b16 %v1442, %v1435
    %v1814 = vpack.c.b16 %v1443, %v1436
    %v1815 = vpack.c.b16 %v1444, %v1437
    %v1816 = vpack.c.b16 %v1445, %v1438
    %v1817 = vpack.c.b16 %v1446, %v1439
    %v1818 = vpack.c.b16 %v1454, %v1447
    %v1819 = vpack.c.b16 %v1455, %v1448
    %v1820 = vpack.c.b16 %v1456, %v1449
    %v1821 = vpack.c.b16 %v1457, %v1450
    %v1822 = vpack.c.b16 %v1458, %v1451
    %v1823 = vpack.c.b16 %v1459, %v1452
    %v1824 = vpack.c.b16 %v1460, %v1453
    %v1825 = vpack.c.b16 %v1468, %v1461
    %v1826 = vpack.c.b16 %v1469, %v1462
    %v1827 = vpack.c.b16 %v1470, %v1463
    %v1828 = vpack.c.b16 %v1471, %v1464
    %v1829 = vpack.c.b16 %v1472, %v1465
    %v1830 = vpack.c.b16 %v1473, %v1466
    %v1831 = vpack.c.b16 %v1474, %v1467
    %v1832 = vpack.c.b16 %v1482, %v1475
    %v1833 = vpack.c.b16 %v1483, %v1476
    %v1834 = vpack.c.b16 %v1484, %v1477
    %v1835 = vpack.c.b16 %v1485, %v1478
    %v1836 = vpack.c.b16 %v1486, %v1479
    %v1837 = vpack.c.b16 %v1487, %v1480
    %v1838 = vpack.c.b16 %v1488, %v1481
    %v1839 = vpack.c.b16 %v1496, %v1489
    %v1840 = vpack.c.b16 %v1497, %v1490
    %v1841 = vpack.c.b16 %v1498, %v1491
    %v1842 = vpack.c.b16 %v1499, %v1492
    %v1843 = vpack.c.b16 %v1500, %v1493
    %v1844 = vpack.c.b16 %v1501, %v1494
    %v1845 = vpack.c.b16 %v1502, %v1495
    %v1846 = vpack.c.b16 %v1510, %v1503
    %v1847 = vpack.c.b16 %v1511, %v1504
    %v1848 = vpack.c.b16 %v1512, %v1505
    %v1849 = vpack.c.b16 %v1513, %v1506
    %v1850 = vpack.c.b16 %v1514, %v1507
    %v1851 = vpack.c.b16 %v1515, %v1508
    %v1852 = vpack.c.b16 %v1516, %v1509
    %v1853 = vpack.c.b16 %v1524, %v1517
    %v1854 = vpack.c.b16 %v1525, %v1518
    %v1855 = vpack.c.b16 %v1526, %v1519
    %v1856 = vpack.c.b16 %v1527, %v1520
    %v1857 = vpack.c.b16 %v1528, %v1521
    %v1858 = vpack.c.b16 %v1529, %v1522
    %v1859 = vpack.c.b16 %v1530, %v1523
    %v1860 = vpack.c.b16 %v1538, %v1531
    %v1861 = vpack.c.b16 %v1539, %v1532
    %v1862 = vpack.c.b16 %v1540, %v1533
    %v1863 = vpack.c.b16 %v1541, %v1534
    %v1864 = vpack.c.b16 %v1542, %v1535
    %v1865 = vpack.c.b16 %v1543, %v1536
    %v1866 = vpack.c.b16 %v1544, %v1537
    %v1867 = vpack.c.b16 %v1552, %v1545
    %v1868 = vpack.c.b16 %v1553, %v1546
    %v1869 = vpack.c.b16 %v1554, %v1547
    %v1870 = vpack.c.b16 %v1555, %v1548
    %v1871 = vpack.c.b16 %v1556, %v1549
    %v1872 = vpack.c.b16 %v1557, %v1550
    %v1873 = vpack.c.b16 %v1558, %v1551
    %v1874 = vpack.c.b16 %v1566, %v1559
    %v1875 = vpack.c.b16 %v1567, %v1560
    %v1876 = vpack.c.b16 %v1568, %v1561
    %v1877 = vpack.c.b16 %v1569, %v1562
    %v1878 = vpack.c.b16 %v1570, %v1563
    %v1879 = vpack.c.b16 %v1571, %v1564
    %v1880 = vpack.c.b16 %v1572, %v1565
    %v1881 = vpack.c.b16 %v1580, %v1573
    %v1882 = vpack.c.b16 %v1581, %v1574
    %v1883 = vpack.c.b16 %v1582, %v1575
    %v1884 = vpack.c.b16 %v1583, %v1576
    %v1885 = vpack.c.b16 %v1584, %v1577
    %v1886 = vpack.c.b16 %v1585, %v1578
    %v1887 = vpack.c.b16 %v1586, %v1579
    %v1888 = vpack.c.b16 %v1594, %v1587
    %v1889 = vpack.c.b16 %v1595, %v1588
    %v1890 = vpack.c.b16 %v1596, %v1589
    %v1891 = vpack.c.b16 %v1597, %v1590
    %v1892 = vpack.c.b16 %v1598, %v1591
    %v1893 = vpack.c.b16 %v1599, %v1592
    %v1894 = vpack.c.b16 %v1600, %v1593
    %v1895 = vpack.c.b16 %v1608, %v1601
    %v1896 = vpack.c.b16 %v1609, %v1602
    %v1897 = vpack.c.b16 %v1610, %v1603
    %v1898 = vpack.c.b16 %v1611, %v1604
    %v1899 = vpack.c.b16 %v1612, %v1605
    %v1900 = vpack.c.b16 %v1613, %v1606
    %v1901 = vpack.c.b16 %v1614, %v1607
    %v1902 = vpack.c.b16 %v1622, %v1615
    %v1903 = vpack.c.b16 %v1623, %v1616
    %v1904 = vpack.c.b16 %v1624, %v1617
    %v1905 = vpack.c.b16 %v1625, %v1618
    %v1906 = vpack.c.b16 %v1626, %v1619
    %v1907 = vpack.c.b16 %v1627, %v1620
    %v1908 = vpack.c.b16 %v1628, %v1621
    %v1909 = vpack.c.b16 %v1636, %v1629
    %v1910 = vpack.c.b16 %v1637, %v1630
    %v1911 = vpack.c.b16 %v1638, %v1631
    %v1912 = vpack.c.b16 %v1639, %v1632
    %v1913 = vpack.c.b16 %v1640, %v1633
    %v1914 = vpack.c.b16 %v1641, %v1634
    %v1915 = vpack.c.b16 %v1642, %v1635
    %v1916 = vpack.c.b16 %v1650, %v1643
    %v1917 = vpack.c.b16 %v1651, %v1644
    %v1918 = vpack.c.b16 %v1652, %v1645
    %v1919 = vpack.c.b16 %v1653, %v1646
    %v1920 = vpack.c.b16 %v1654, %v1647
    %v1921 = vpack.c.b16 %v1655, %v1648
    %v1922 = vpack.c.b16 %v1656, %v1649
    %v1923 = vpack.c.b16 %v1664, %v1657
    %v1924 = vpack.c.b16 %v1665, %v1658
    %v1925 = vpack.c.b16 %v1666, %v1659
    %v1926 = vpack.c.b16 %v1667, %v1660
    %v1927 = vpack.c.b16 %v1668, %v1661
    %v1928 = vpack.c.b16 %v1669, %v1662
    %v1929 = vpack.c.b16 %v1670, %v1663
    %v1930 = vpack.c.b16 %v1678, %v1671
    %v1931 = vpack.c.b16 %v1679, %v1672
    %v1932 = vpack.c.b16 %v1680, %v1673
    %v1933 = vpack.c.b16 %v1681, %v1674
    %v1934 = vpack.c.b16 %v1682, %v1675
    %v1935 = vpack.c.b16 %v1683, %v1676
    %v1936 = vpack.c.b16 %v1684, %v1677
    %v1937 = vpack.c.b16 %v1692, %v1685
    %v1938 = vpack.c.b16 %v1693, %v1686
    %v1939 = vpack.c.b16 %v1694, %v1687
    %v1940 = vpack.c.b16 %v1695, %v1688
    %v1941 = vpack.c.b16 %v1696, %v1689
    %v1942 = vpack.c.b16 %v1697, %v1690
    %v1943 = vpack.c.b16 %v1698, %v1691
    %v1944 = vpack.c.b16 %v1706, %v1699
    %v1945 = vpack.c.b16 %v1707, %v1700
    %v1946 = vpack.c.b16 %v1708, %v1701
    %v1947 = vpack.c.b16 %v1709, %v1702
    %v1948 = vpack.c.b16 %v1710, %v1703
    %v1949 = vpack.c.b16 %v1711, %v1704
    %v1950 = vpack.c.b16 %v1712, %v1705
    %v1951 = vpack.c.b16 %v1720, %v1713
    %v1952 = vpack.c.b16 %v1721, %v1714
    %v1953 = vpack.c.b16 %v1722, %v1715
    %v1954 = vpack.c.b16 %v1723, %v1716
    %v1955 = vpack.c.b16 %v1724, %v1717
    %v1956 = vpack.c.b16 %v1725, %v1718
    %v1957 = vpack.c.b16 %v1726, %v1719
    %v1958 = vpack.c.b16 %v1734, %v1727
    %v1959 = vpack.c.b16 %v1735, %v1728
    %v1960 = vpack.c.b16 %v1736, %v1729
    %v1961 = vpack.c.b16 %v1737, %v1730
    %v1962 = vpack.c.b16 %v1738, %v1731
    %v1963 = vpack.c.b16 %v1739, %v1732
    %v1964 = vpack.c.b16 %v1740, %v1733
    %2189 = vmatprep.subr.bf16.mxu0 %v1742
    %2190 = vmatpush1.bf16.msra.mxu0 %v1741
    %2191 = vmatprep.subr.bf16.mxu0 %v1749
    %2192 = vmatpush1.bf16.msra.mxu0 %v1748
    %2193 = vmatprep.subr.bf16.mxu0 %v1756
    %2194 = vmatpush1.bf16.msra.mxu0 %v1755
    %2195 = vmatprep.subr.bf16.mxu0 %v1763
    %2196 = vmatpush1.bf16.msra.mxu0 %v1762
    %2197 = vmatprep.subr.bf16.mxu0 %v1770
    %2198 = vmatpush1.bf16.msra.mxu0 %v1769
    %2199 = vmatprep.subr.bf16.mxu0 %v1777
    %2200 = vmatpush1.bf16.msra.mxu0 %v1776
    %2201 = vmatprep.subr.bf16.mxu0 %v1784
    %2202 = vmatpush1.bf16.msra.mxu0 %v1783
    %2203 = vmatprep.subr.bf16.mxu0 %v1791
    %2204 = vmatpush1.bf16.msra.mxu0 %v1790
    %2205 = vmatprep.subr.bf16.mxu0 %v1798
    %2206 = vmatpush1.bf16.msra.mxu0 %v1797
    %2207 = vmatprep.subr.bf16.mxu0 %v1805
    %2208 = vmatpush1.bf16.msra.mxu0 %v1804
    %2209 = vmatprep.subr.bf16.mxu0 %v1812
    %2210 = vmatpush1.bf16.msra.mxu0 %v1811
    %2211 = vmatprep.subr.bf16.mxu0 %v1819
    %2212 = vmatpush1.bf16.msra.mxu0 %v1818
    %2213 = vmatprep.subr.bf16.mxu0 %v1826
    %2214 = vmatpush1.bf16.msra.mxu0 %v1825
    %2215 = vmatprep.subr.bf16.mxu0 %v1833
    %2216 = vmatpush1.bf16.msra.mxu0 %v1832
    %2217 = vmatprep.subr.bf16.mxu0 %v1840
    %2218 = vmatpush1.bf16.msra.mxu0 %v1839
    %2219 = vmatprep.subr.bf16.mxu0 %v1847
    %2220 = vmatpush1.bf16.msra.mxu0 %v1846
    %2221 = vmatprep.mubr.bf16.mxu0 %v741
    %2222 = vmatmul.mubr.bf16.gmra.mrb[0].mxu0 %v740
    %v2223 = vpop.f32.mrb[0].mxu0
    %v2224 = vadd.f32 %v1005, %v2223
    %v2225 = vpop.f32.mrb[0].mxu0
    %v2226 = vadd.f32 %v1009, %v2225
    %v2227 = vpop.f32.mrb[0].mxu0
    %v2228 = vpop.f32.mrb[0].mxu0
    %2229 = vdwg.mxu0
    %2230 = vmatprep.subr.bf16.mxu0 %v1854
    %2231 = vmatpush1.bf16.msra.mxu0 %v1853
    %2232 = vmatprep.subr.bf16.mxu0 %v1861
    %2233 = vmatpush1.bf16.msra.mxu0 %v1860
    %2234 = vmatprep.subr.bf16.mxu0 %v1868
    %2235 = vmatpush1.bf16.msra.mxu0 %v1867
    %2236 = vmatprep.subr.bf16.mxu0 %v1875
    %2237 = vmatpush1.bf16.msra.mxu0 %v1874
    %2238 = vmatprep.subr.bf16.mxu0 %v1882
    %2239 = vmatpush1.bf16.msra.mxu0 %v1881
    %2240 = vmatprep.subr.bf16.mxu0 %v1889
    %2241 = vmatpush1.bf16.msra.mxu0 %v1888
    %2242 = vmatprep.subr.bf16.mxu0 %v1896
    %2243 = vmatpush1.bf16.msra.mxu0 %v1895
    %2244 = vmatprep.subr.bf16.mxu0 %v1903
    %2245 = vmatpush1.bf16.msra.mxu0 %v1902
    %2246 = vmatprep.subr.bf16.mxu0 %v1910
    %2247 = vmatpush1.bf16.msra.mxu0 %v1909
    %2248 = vmatprep.subr.bf16.mxu0 %v1917
    %2249 = vmatpush1.bf16.msra.mxu0 %v1916
    %2250 = vmatprep.subr.bf16.mxu0 %v1924
    %2251 = vmatpush1.bf16.msra.mxu0 %v1923
    %2252 = vmatprep.subr.bf16.mxu0 %v1931
    %2253 = vmatpush1.bf16.msra.mxu0 %v1930
    %2254 = vmatprep.subr.bf16.mxu0 %v1938
    %2255 = vmatpush1.bf16.msra.mxu0 %v1937
    %2256 = vmatprep.subr.bf16.mxu0 %v1945
    %2257 = vmatpush1.bf16.msra.mxu0 %v1944
    %2258 = vmatprep.subr.bf16.mxu0 %v1952
    %2259 = vmatpush1.bf16.msra.mxu0 %v1951
    %2260 = vmatprep.subr.bf16.mxu0 %v1959
    %2261 = vmatpush1.bf16.msra.mxu0 %v1958
    %2262 = vmatprep.mubr.bf16.mxu0 %v743
    %2263 = vmatmul.mubr.bf16.gmra.mrb[0].mxu0 %v742
    %v2264 = vpop.f32.mrb[0].mxu0
    %v2265 = vadd.f32 %v2224, %v2264
    %v2266 = vpop.f32.mrb[0].mxu0
    %v2267 = vadd.f32 %v2226, %v2266
    %v2268 = vpop.f32.mrb[0].mxu0
    %v2269 = vpop.f32.mrb[0].mxu0
    %2270 = vdwg.mxu0
    %2271 = vmatprep.subr.bf16.mxu0 %v1744
    %2272 = vmatpush1.bf16.msra.mxu0 %v1743
    %2273 = vmatprep.subr.bf16.mxu0 %v1751
    %2274 = vmatpush1.bf16.msra.mxu0 %v1750
    %2275 = vmatprep.subr.bf16.mxu0 %v1758
    %2276 = vmatpush1.bf16.msra.mxu0 %v1757
    %2277 = vmatprep.subr.bf16.mxu0 %v1765
    %2278 = vmatpush1.bf16.msra.mxu0 %v1764
    %2279 = vmatprep.subr.bf16.mxu0 %v1772
    %2280 = vmatpush1.bf16.msra.mxu0 %v1771
    %2281 = vmatprep.subr.bf16.mxu0 %v1779
    %2282 = vmatpush1.bf16.msra.mxu0 %v1778
    %2283 = vmatprep.subr.bf16.mxu0 %v1786
    %2284 = vmatpush1.bf16.msra.mxu0 %v1785
    %2285 = vmatprep.subr.bf16.mxu0 %v1793
    %2286 = vmatpush1.bf16.msra.mxu0 %v1792
    %2287 = vmatprep.subr.bf16.mxu0 %v1800
    %2288 = vmatpush1.bf16.msra.mxu0 %v1799
    %2289 = vmatprep.subr.bf16.mxu0 %v1807
    %2290 = vmatpush1.bf16.msra.mxu0 %v1806
    %2291 = vmatprep.subr.bf16.mxu0 %v1814
    %2292 = vmatpush1.bf16.msra.mxu0 %v1813
    %2293 = vmatprep.subr.bf16.mxu0 %v1821
    %2294 = vmatpush1.bf16.msra.mxu0 %v1820
    %2295 = vmatprep.subr.bf16.mxu0 %v1828
    %2296 = vmatpush1.bf16.msra.mxu0 %v1827
    %2297 = vmatprep.subr.bf16.mxu0 %v1835
    %2298 = vmatpush1.bf16.msra.mxu0 %v1834
    %2299 = vmatprep.subr.bf16.mxu0 %v1842
    %2300 = vmatpush1.bf16.msra.mxu0 %v1841
    %2301 = vmatprep.subr.bf16.mxu0 %v1849
    %2302 = vmatpush1.bf16.msra.mxu0 %v1848
    %2303 = vmatprep.mubr.bf16.mxu0 %v741
    %2304 = vmatmul.mubr.bf16.gmra.mrb[0].mxu0 %v740
    %v2305 = vpop.f32.mrb[0].mxu0
    %v2306 = vadd.f32 %v1013, %v2305
    %v2307 = vpop.f32.mrb[0].mxu0
    %v2308 = vadd.f32 %v1017, %v2307
    %v2309 = vpop.f32.mrb[0].mxu0
    %v2310 = vpop.f32.mrb[0].mxu0
    %2311 = vdwg.mxu0
    %2312 = vmatprep.subr.bf16.mxu0 %v1856
    %2313 = vmatpush1.bf16.msra.mxu0 %v1855
    %2314 = vmatprep.subr.bf16.mxu0 %v1863
    %2315 = vmatpush1.bf16.msra.mxu0 %v1862
    %2316 = vmatprep.subr.bf16.mxu0 %v1870
    %2317 = vmatpush1.bf16.msra.mxu0 %v1869
    %2318 = vmatprep.subr.bf16.mxu0 %v1877
    %2319 = vmatpush1.bf16.msra.mxu0 %v1876
    %2320 = vmatprep.subr.bf16.mxu0 %v1884
    %2321 = vmatpush1.bf16.msra.mxu0 %v1883
    %2322 = vmatprep.subr.bf16.mxu0 %v1891
    %2323 = vmatpush1.bf16.msra.mxu0 %v1890
    %2324 = vmatprep.subr.bf16.mxu0 %v1898
    %2325 = vmatpush1.bf16.msra.mxu0 %v1897
    %2326 = vmatprep.subr.bf16.mxu0 %v1905
    %2327 = vmatpush1.bf16.msra.mxu0 %v1904
    %2328 = vmatprep.subr.bf16.mxu0 %v1912
    %2329 = vmatpush1.bf16.msra.mxu0 %v1911
    %2330 = vmatprep.subr.bf16.mxu0 %v1919
    %2331 = vmatpush1.bf16.msra.mxu0 %v1918
    %2332 = vmatprep.subr.bf16.mxu0 %v1926
    %2333 = vmatpush1.bf16.msra.mxu0 %v1925
    %2334 = vmatprep.subr.bf16.mxu0 %v1933
    %2335 = vmatpush1.bf16.msra.mxu0 %v1932
    %2336 = vmatprep.subr.bf16.mxu0 %v1940
    %2337 = vmatpush1.bf16.msra.mxu0 %v1939
    %2338 = vmatprep.subr.bf16.mxu0 %v1947
    %2339 = vmatpush1.bf16.msra.mxu0 %v1946
    %2340 = vmatprep.subr.bf16.mxu0 %v1954
    %2341 = vmatpush1.bf16.msra.mxu0 %v1953
    %2342 = vmatprep.subr.bf16.mxu0 %v1961
    %2343 = vmatpush1.bf16.msra.mxu0 %v1960
    %2344 = vmatprep.mubr.bf16.mxu0 %v743
    %2345 = vmatmul.mubr.bf16.gmra.mrb[0].mxu0 %v742
    %v2346 = vpop.f32.mrb[0].mxu0
    %v2347 = vadd.f32 %v2306, %v2346
    %v2348 = vpop.f32.mrb[0].mxu0
    %v2349 = vadd.f32 %v2308, %v2348
    %v2350 = vpop.f32.mrb[0].mxu0
    %v2351 = vpop.f32.mrb[0].mxu0
    %2352 = vdwg.mxu0
    %2353 = vmatprep.subr.bf16.mxu0 %v1746
    %2354 = vmatpush1.bf16.msra.mxu0 %v1745
    %2355 = vmatprep.subr.bf16.mxu0 %v1753
    %2356 = vmatpush1.bf16.msra.mxu0 %v1752
    %2357 = vmatprep.subr.bf16.mxu0 %v1760
    %2358 = vmatpush1.bf16.msra.mxu0 %v1759
    %2359 = vmatprep.subr.bf16.mxu0 %v1767
    %2360 = vmatpush1.bf16.msra.mxu0 %v1766
    %2361 = vmatprep.subr.bf16.mxu0 %v1774
    %2362 = vmatpush1.bf16.msra.mxu0 %v1773
    %2363 = vmatprep.subr.bf16.mxu0 %v1781
    %2364 = vmatpush1.bf16.msra.mxu0 %v1780
    %2365 = vmatprep.subr.bf16.mxu0 %v1788
    %2366 = vmatpush1.bf16.msra.mxu0 %v1787
    %2367 = vmatprep.subr.bf16.mxu0 %v1795
    %2368 = vmatpush1.bf16.msra.mxu0 %v1794
    %2369 = vmatprep.subr.bf16.mxu0 %v1802
    %2370 = vmatpush1.bf16.msra.mxu0 %v1801
    %2371 = vmatprep.subr.bf16.mxu0 %v1809
    %2372 = vmatpush1.bf16.msra.mxu0 %v1808
    %2373 = vmatprep.subr.bf16.mxu0 %v1816
    %2374 = vmatpush1.bf16.msra.mxu0 %v1815
    %2375 = vmatprep.subr.bf16.mxu0 %v1823
    %2376 = vmatpush1.bf16.msra.mxu0 %v1822
    %2377 = vmatprep.subr.bf16.mxu0 %v1830
    %2378 = vmatpush1.bf16.msra.mxu0 %v1829
    %2379 = vmatprep.subr.bf16.mxu0 %v1837
    %2380 = vmatpush1.bf16.msra.mxu0 %v1836
    %2381 = vmatprep.subr.bf16.mxu0 %v1844
    %2382 = vmatpush1.bf16.msra.mxu0 %v1843
    %2383 = vmatprep.subr.bf16.mxu0 %v1851
    %2384 = vmatpush1.bf16.msra.mxu0 %v1850
    %2385 = vmatprep.mubr.bf16.mxu0 %v741
    %2386 = vmatmul.mubr.bf16.gmra.mrb[0].mxu0 %v740
    %v2387 = vpop.f32.mrb[0].mxu0
    %v2388 = vadd.f32 %v1021, %v2387
    %v2389 = vpop.f32.mrb[0].mxu0
    %v2390 = vadd.f32 %v1025, %v2389
    %v2391 = vpop.f32.mrb[0].mxu0
    %v2392 = vpop.f32.mrb[0].mxu0
    %2393 = vdwg.mxu0
    %2394 = vmatprep.subr.bf16.mxu0 %v1858
    %2395 = vmatpush1.bf16.msra.mxu0 %v1857
    %2396 = vmatprep.subr.bf16.mxu0 %v1865
    %2397 = vmatpush1.bf16.msra.mxu0 %v1864
    %2398 = vmatprep.subr.bf16.mxu0 %v1872
    %2399 = vmatpush1.bf16.msra.mxu0 %v1871
    %2400 = vmatprep.subr.bf16.mxu0 %v1879
    %2401 = vmatpush1.bf16.msra.mxu0 %v1878
    %2402 = vmatprep.subr.bf16.mxu0 %v1886
    %2403 = vmatpush1.bf16.msra.mxu0 %v1885
    %2404 = vmatprep.subr.bf16.mxu0 %v1893
    %2405 = vmatpush1.bf16.msra.mxu0 %v1892
    %2406 = vmatprep.subr.bf16.mxu0 %v1900
    %2407 = vmatpush1.bf16.msra.mxu0 %v1899
    %2408 = vmatprep.subr.bf16.mxu0 %v1907
    %2409 = vmatpush1.bf16.msra.mxu0 %v1906
    %2410 = vmatprep.subr.bf16.mxu0 %v1914
    %2411 = vmatpush1.bf16.msra.mxu0 %v1913
    %2412 = vmatprep.subr.bf16.mxu0 %v1921
    %2413 = vmatpush1.bf16.msra.mxu0 %v1920
    %2414 = vmatprep.subr.bf16.mxu0 %v1928
    %2415 = vmatpush1.bf16.msra.mxu0 %v1927
    %2416 = vmatprep.subr.bf16.mxu0 %v1935
    %2417 = vmatpush1.bf16.msra.mxu0 %v1934
    %2418 = vmatprep.subr.bf16.mxu0 %v1942
    %2419 = vmatpush1.bf16.msra.mxu0 %v1941
    %2420 = vmatprep.subr.bf16.mxu0 %v1949
    %2421 = vmatpush1.bf16.msra.mxu0 %v1948
    %2422 = vmatprep.subr.bf16.mxu0 %v1956
    %2423 = vmatpush1.bf16.msra.mxu0 %v1955
    %2424 = vmatprep.subr.bf16.mxu0 %v1963
    %2425 = vmatpush1.bf16.msra.mxu0 %v1962
    %2426 = vmatprep.mubr.bf16.mxu0 %v743
    %2427 = vmatmul.mubr.bf16.gmra.mrb[0].mxu0 %v742
    %v2428 = vpop.f32.mrb[0].mxu0
    %v2429 = vadd.f32 %v2388, %v2428
    %v2430 = vpop.f32.mrb[0].mxu0
    %v2431 = vadd.f32 %v2390, %v2430
    %v2432 = vpop.f32.mrb[0].mxu0
    %v2433 = vpop.f32.mrb[0].mxu0
    %2434 = vdwg.mxu0
    %2435 = vmatprep.subr.bf16.mxu0 0
    %2436 = vmatpush1.bf16.msra.mxu0 %v1747
    %2437 = vmatprep.subr.bf16.mxu0 0
    %2438 = vmatpush1.bf16.msra.mxu0 %v1754
    %2439 = vmatprep.subr.bf16.mxu0 0
    %2440 = vmatpush1.bf16.msra.mxu0 %v1761
    %2441 = vmatprep.subr.bf16.mxu0 0
    %2442 = vmatpush1.bf16.msra.mxu0 %v1768
    %2443 = vmatprep.subr.bf16.mxu0 0
    %2444 = vmatpush1.bf16.msra.mxu0 %v1775
    %2445 = vmatprep.subr.bf16.mxu0 0
    %2446 = vmatpush1.bf16.msra.mxu0 %v1782
    %2447 = vmatprep.subr.bf16.mxu0 0
    %2448 = vmatpush1.bf16.msra.mxu0 %v1789
    %2449 = vmatprep.subr.bf16.mxu0 0
    %2450 = vmatpush1.bf16.msra.mxu0 %v1796
    %2451 = vmatprep.subr.bf16.mxu0 0
    %2452 = vmatpush1.bf16.msra.mxu0 %v1803
    %2453 = vmatprep.subr.bf16.mxu0 0
    %2454 = vmatpush1.bf16.msra.mxu0 %v1810
    %2455 = vmatprep.subr.bf16.mxu0 0
    %2456 = vmatpush1.bf16.msra.mxu0 %v1817
    %2457 = vmatprep.subr.bf16.mxu0 0
    %2458 = vmatpush1.bf16.msra.mxu0 %v1824
    %2459 = vmatprep.subr.bf16.mxu0 0
    %2460 = vmatpush1.bf16.msra.mxu0 %v1831
    %2461 = vmatprep.subr.bf16.mxu0 0
    %2462 = vmatpush1.bf16.msra.mxu0 %v1838
    %2463 = vmatprep.subr.bf16.mxu0 0
    %2464 = vmatpush1.bf16.msra.mxu0 %v1845
    %2465 = vmatprep.subr.bf16.mxu0 0
    %2466 = vmatpush1.bf16.msra.mxu0 %v1852
    %2467 = vmatprep.mubr.bf16.mxu0 %v741
    %2468 = vmatmul.mubr.bf16.gmra.mrb[0].mxu0 %v740
    %v2469 = vpop.f32.mrb[0].mxu0
    %v2470 = vadd.f32 %v1029, %v2469
    %v2471 = vpop.f32.mrb[0].mxu0
    %v2472 = vpop.f32.mrb[0].mxu0
    %v2473 = vpop.f32.mrb[0].mxu0
    %2474 = vdwg.mxu0
    %2475 = vmatprep.subr.bf16.mxu0 0
    %2476 = vmatpush1.bf16.msra.mxu0 %v1859
    %2477 = vmatprep.subr.bf16.mxu0 0
    %2478 = vmatpush1.bf16.msra.mxu0 %v1866
    %2479 = vmatprep.subr.bf16.mxu0 0
    %2480 = vmatpush1.bf16.msra.mxu0 %v1873
    %2481 = vmatprep.subr.bf16.mxu0 0
    %2482 = vmatpush1.bf16.msra.mxu0 %v1880
    %2483 = vmatprep.subr.bf16.mxu0 0
    %2484 = vmatpush1.bf16.msra.mxu0 %v1887
    %2485 = vmatprep.subr.bf16.mxu0 0
    %2486 = vmatpush1.bf16.msra.mxu0 %v1894
    %2487 = vmatprep.subr.bf16.mxu0 0
    %2488 = vmatpush1.bf16.msra.mxu0 %v1901
    %2489 = vmatprep.subr.bf16.mxu0 0
    %2490 = vmatpush1.bf16.msra.mxu0 %v1908
    %2491 = vmatprep.subr.bf16.mxu0 0
    %2492 = vmatpush1.bf16.msra.mxu0 %v1915
    %2493 = vmatprep.subr.bf16.mxu0 0
    %2494 = vmatpush1.bf16.msra.mxu0 %v1922
    %2495 = vmatprep.subr.bf16.mxu0 0
    %2496 = vmatpush1.bf16.msra.mxu0 %v1929
    %2497 = vmatprep.subr.bf16.mxu0 0
    %2498 = vmatpush1.bf16.msra.mxu0 %v1936
    %2499 = vmatprep.subr.bf16.mxu0 0
    %2500 = vmatpush1.bf16.msra.mxu0 %v1943
    %2501 = vmatprep.subr.bf16.mxu0 0
    %2502 = vmatpush1.bf16.msra.mxu0 %v1950
    %2503 = vmatprep.subr.bf16.mxu0 0
    %2504 = vmatpush1.bf16.msra.mxu0 %v1957
    %2505 = vmatprep.subr.bf16.mxu0 0
    %2506 = vmatpush1.bf16.msra.mxu0 %v1964
    %2507 = vmatprep.mubr.bf16.mxu0 %v743
    %2508 = vmatmul.mubr.bf16.gmra.mrb[0].mxu0 %v742
    %v2509 = vpop.f32.mrb[0].mxu0
    %v2510 = vadd.f32 %v2470, %v2509
    %v2511 = vpop.f32.mrb[0].mxu0
    %v2512 = vpop.f32.mrb[0].mxu0
    %v2513 = vpop.f32.mrb[0].mxu0
    %2514 = vdwg.mxu0
    %v2515 = vtanh.pop %v2265
    %v2516 = vtanh.pop %v2267
    %v2517 = vtanh.pop %v2347
    %v2518 = vtanh.pop %v2349
    %v2519 = vtanh.pop %v2429
    %v2520 = vtanh.pop %v2431
    %v2521 = vtanh.pop %v2510
    %2522 = vst [vmem:[#allocation7] sm:$0xff] %v2515
    %2523 = vst [vmem:[#allocation7 + $0x8] sm:$0xff] %v2516
    %2524 = vst [vmem:[#allocation7 + $0x10] sm:$0xff] %v2517
    %2525 = vst [vmem:[#allocation7 + $0x18] sm:$0xff] %v2518
    %2526 = vst [vmem:[#allocation7 + $0x20] sm:$0xff] %v2519
    %2527 = vst [vmem:[#allocation7 + $0x28] sm:$0xff] %v2520
    %2528 = vst [vmem:[#allocation7 + $0x30] sm:$0xff] %v2521
    // Predicated region
    $region46: #{ad_forward.1} parent=1 // pred_check
      _
    $region47: #{ad_forward.1} parent=1 // pred_check_branch
      %2530 = sbr.rel (0) target = $region49
    $region48: #{ad_forward.1} parent=1 // pred_region
      %s2532 = ssub.s32 896, 896
      %2533 = vsyncadd [#allocation4], %s2532
      %s2535 = sshll.u32 [#allocation7], 4
      %s2536 = int_to_ptr.vmem [resolvable:$true] %s2535
      %2538 = dma.vmem_to_hbm [thread:$0]  %s2536, 896, %s9, [#allocation4]
    $region49: #{ad_forward.1} parent=1 // pred_fallthru
      _
    // Predicated region
    $region50: #{ad_forward.1} parent=1 // pred_check
      _
    $region51: #{ad_forward.1} parent=1 // pred_check_branch
      %2540 = sbr.rel (0) target = $region53
    $region52: #{ad_forward.1} parent=1 // pred_region
      %2541 = dma.done [#allocation4], 896
    $region53: #{ad_forward.1} parent=1 // pred_fallthru
      _
    %2542 = vsyncpa [#allocation3], 1
    %2543 = vsyncpa [#allocation6], 1
    %2544 = vsyncpa [#allocation4], 1

</llo_original>
